<compile_context>
chip_gen: v7x
topology: tpu7x:2x2x1
jax: 0.10.0
libtpu: 0.0.40
codegen_flags: <defaults>
</compile_context>

<pallas_src>
import functools
import math

import jax
import jax.numpy as jnp
import numpy as np
from jax.experimental import pallas as pl
from jax.experimental.pallas import tpu as pltpu


# --------------------------------------------------------------------------- #
# Kernel
# --------------------------------------------------------------------------- #
def _residual_attention_block_kernel(*refs, num_heads, ln_eps, has_mask, f_chunk):
    """One batch block per grid step.

    x_ref     : (b_blk, L, D)  batch-major input slab
    mask_ref  : (L, L)         additive attention mask (only when has_mask)
    wqkv_ref  : (D, 3D) bf16   fused q|k|v projection (x @ W layout, q-scale folded in)
    bqkv_ref  : (1, 3D) f32
    wo_ref    : (D, D)  bf16   output projection (x @ W layout);  bo (1, D) f32
    wfc/wpj   : (D, F) / (F, D) bf16 MLP weights; biases (1, F) / (1, D) f32
    ln*       : (1, D) f32     LayerNorm affine params
    out_ref   : (b_blk, L, D)
    """
    if has_mask:
        (x_ref, mask_ref,
         ln1w_ref, ln1b_ref, wqkv_ref, bqkv_ref, wo_ref, bo_ref,
         ln2w_ref, ln2b_ref, wfc_ref, bfc_ref, wpj_ref, bpj_ref,
         out_ref) = refs
    else:
        (x_ref,
         ln1w_ref, ln1b_ref, wqkv_ref, bqkv_ref, wo_ref, bo_ref,
         ln2w_ref, ln2b_ref, wfc_ref, bfc_ref, wpj_ref, bpj_ref,
         out_ref) = refs
        mask_ref = None

    B, L, D = x_ref.shape
    H = num_heads
    hd = D // H
    T = B * L
    F = wfc_ref.shape[1]
    mm_dtype = wqkv_ref.dtype                      # matmul operand dtype (bf16)

    # Batch-major token matrix; the block is already (B, L, D) so this reshape
    # is free (no in-kernel relayout of x).
    x2d = x_ref[...].astype(jnp.float32).reshape(T, D)

    def layer_norm(v, w_ref, b_ref):               # f32 math (matches fp32 LN)
        mu = jnp.mean(v, axis=-1, keepdims=True)
        c = v - mu
        var = jnp.mean(c * c, axis=-1, keepdims=True)
        return c * jax.lax.rsqrt(var + ln_eps) * w_ref[...] + b_ref[...]

    # ---------------- attention branch: x + out_proj(MHA(ln_1(x))) ----------
    t = layer_norm(x2d, ln1w_ref, ln1b_ref)                              # (T, D)
    qkv = jnp.dot(t.astype(mm_dtype), wqkv_ref[...],
                  preferred_element_type=jnp.float32) + bqkv_ref[...]    # (T, 3D)

    def to_heads(z2d):
        # (T, D) -> (H*B, L, hd): static lane slices per head, stacked head-major.
        zh = jnp.stack([z2d[:, h * hd:(h + 1) * hd] for h in range(H)], axis=0)
        return zh.reshape(H * B, L, hd)

    qh = to_heads(qkv[:, :D].astype(mm_dtype))          # scale already folded in
    kh = to_heads(qkv[:, D:2 * D].astype(mm_dtype))
    vh = to_heads(qkv[:, 2 * D:].astype(mm_dtype))

    s = jnp.einsum('bqe,bke->bqk', qh, kh,
                   preferred_element_type=jnp.float32)                   # (H*B, L, L)
    if has_mask:
        s = s + mask_ref[...]
    s = s - jnp.max(s, axis=-1, keepdims=True)
    p = jnp.exp(s)
    p = p * pl.reciprocal(jnp.sum(p, axis=-1, keepdims=True), approx=True)
    ctx = jnp.einsum('bqk,bke->bqe', p.astype(mm_dtype), vh,
                     preferred_element_type=jnp.float32)                 # (H*B, L, hd)

    # Re-concatenate heads along lanes -> (T, D), then ONE dense output matmul.
    ctx = ctx.reshape(H, T, hd)
    ctx2d = jnp.concatenate([ctx[h] for h in range(H)], axis=-1)         # (T, D)
    attn = jnp.dot(ctx2d.astype(mm_dtype), wo_ref[...],
                   preferred_element_type=jnp.float32) + bo_ref[...]
    y = x2d + attn

    # ---------------- MLP branch: y + c_proj(QuickGELU(c_fc(ln_2(y)))) ------
    t2 = layer_norm(y, ln2w_ref, ln2b_ref).astype(mm_dtype)              # (T, D)
    m = jnp.zeros((T, D), jnp.float32)
    for c in range(F // f_chunk):                    # F-tiled: bounds the (T, F) h1
        lo = c * f_chunk
        h1 = jnp.dot(t2, wfc_ref[:, lo:lo + f_chunk],
                     preferred_element_type=jnp.float32) + bfc_ref[:, lo:lo + f_chunk]
        h1 = h1 * (1.0 / (1.0 + jnp.exp(-1.702 * h1)))                   # QuickGELU (f32)
        m = m + jnp.dot(h1.astype(mm_dtype), wpj_ref[lo:lo + f_chunk, :],
                        preferred_element_type=jnp.float32)
    y = y + m + bpj_ref[...]

    out_ref[...] = y.reshape(B, L, D).astype(out_ref.dtype)


# --------------------------------------------------------------------------- #
# Wrapper helpers
# --------------------------------------------------------------------------- #
def _pick_f_chunk(F, max_chunk=1024):
    if F <= max_chunk:
        return F
    for c in range(max_chunk, 0, -128):
        if F % c == 0:
            return c
    return F


def _pick_batch_block(N, L, D, F, H, budget_bytes=16 * 2**20):
    """Largest divisor of N whose f32 activation footprint fits the budget and
    (when N >= 2) leaves the grid with >= 2 steps for the 2 v7x TensorCores."""
    f_chunk = _pick_f_chunk(F)
    per_b = 4 * L * (12 * D + 3 * H * L + 3 * f_chunk)      # rough f32 bytes / batch elem
    cap = max(1, budget_bytes // max(per_b, 1))
    if N >= 2:
        cap = min(cap, N // 2)
    cap = max(1, min(cap, N))
    for b in range(cap, 0, -1):
        if N % b == 0:
            return b
    return 1


def _vmem_limit_bytes(L, b_blk, D, F, H, f_chunk, mm_dtype, x_dtype):
    T = b_blk * L
    wb = jnp.dtype(mm_dtype).itemsize
    weights = (3 * D * D + D * D + 2 * D * F) * wb + (6 * D + 2 * F + 4 * D) * 4
    io = 2 * T * D * jnp.dtype(x_dtype).itemsize
    acts = 4 * (12 * T * D + 3 * H * b_blk * L * L + 3 * T * f_chunk)
    est = int((2 * weights + 2 * io + acts) * 1.5)           # x2: default double-buffering
    return int(min(max(est, 32 * 2**20), 120 * 2**20))


# --------------------------------------------------------------------------- #
# Public wrapper (PyTorch (L, N, D) layout in / out)
# --------------------------------------------------------------------------- #
def residual_attention_block(x, *, num_heads,
                             ln1_w, ln1_b, in_proj_w, in_proj_b,
                             out_proj_w, out_proj_b,
                             ln2_w, ln2_b, fc_w, fc_b, proj_w, proj_b,
                             attn_mask=None, ln_eps=1e-5,
                             matmul_dtype=jnp.bfloat16):
    L, N, D = x.shape
    H = num_heads
    assert D % H == 0
    hd = D // H
    F = fc_w.shape[0]                                        # 4 * D
    scale = 1.0 / math.sqrt(hd)

    # Split PyTorch's packed in_proj, build the fused lane-dense QKV weight
    # (x @ W layout); the 1/sqrt(hd) query scale is folded into the q columns.
    wq, wk, wv = in_proj_w[:D], in_proj_w[D:2 * D], in_proj_w[2 * D:]
    bq, bk, bv = in_proj_b[:D], in_proj_b[D:2 * D], in_proj_b[2 * D:]
    w_qkv = jnp.concatenate([wq.T * scale, wk.T, wv.T], axis=1).astype(matmul_dtype)  # (D, 3D)
    b_qkv = jnp.concatenate([bq * scale, bk, bv]).reshape(1, 3 * D).astype(jnp.float32)

    wo = out_proj_w.T.astype(matmul_dtype)                   # (D, D)
    bo = out_proj_b.reshape(1, D).astype(jnp.float32)
    wfc = fc_w.T.astype(matmul_dtype)                        # (D, F)
    bfc = fc_b.reshape(1, F).astype(jnp.float32)
    wpj = proj_w.T.astype(matmul_dtype)                      # (F, D)
    bpj = proj_b.reshape(1, D).astype(jnp.float32)

    ln1w = ln1_w.reshape(1, D).astype(jnp.float32)
    ln1b = ln1_b.reshape(1, D).astype(jnp.float32)
    ln2w = ln2_w.reshape(1, D).astype(jnp.float32)
    ln2b = ln2_b.reshape(1, D).astype(jnp.float32)

    has_mask = attn_mask is not None
    b_blk = _pick_batch_block(N, L, D, F, H)
    f_chunk = _pick_f_chunk(F)
    grid = (N // b_blk,)

    # One XLA HBM transpose so the kernel gets batch-major (b_blk, L, D) blocks
    # and needs no in-kernel batch reorder; transposed back afterwards.
    x_nld = jnp.transpose(x, (1, 0, 2))

    kernel = functools.partial(_residual_attention_block_kernel,
                               num_heads=H, ln_eps=ln_eps,
                               has_mask=has_mask, f_chunk=f_chunk)

    def full(shape):
        # whole-array resident block, constant index_map.  (On v7x this could
        # additionally use pipeline_mode=pl.Buffered(1) to drop the second buffer.)
        return pl.BlockSpec(shape, lambda nb: (0,) * len(shape))

    in_specs = [pl.BlockSpec((b_blk, L, D), lambda nb: (nb, 0, 0))]       # x
    args = [x_nld]
    if has_mask:
        in_specs.append(full((L, L)))
        args.append(jnp.asarray(attn_mask, jnp.float32))
    in_specs += [
        full((1, D)), full((1, D)),             # ln_1 w, b
        full((D, 3 * D)), full((1, 3 * D)),     # fused qkv
        full((D, D)), full((1, D)),             # out proj
        full((1, D)), full((1, D)),             # ln_2 w, b
        full((D, F)), full((1, F)),             # c_fc
        full((F, D)), full((1, D)),             # c_proj
    ]
    args += [ln1w, ln1b, w_qkv, b_qkv, wo, bo, ln2w, ln2b, wfc, bfc, wpj, bpj]

    out_nld = pl.pallas_call(
        kernel,
        out_shape=jax.ShapeDtypeStruct((N, L, D), x.dtype),
        grid_spec=pltpu.PrefetchScalarGridSpec(
            num_scalar_prefetch=0,
            grid=grid,
            in_specs=in_specs,
            out_specs=pl.BlockSpec((b_blk, L, D), lambda nb: (nb, 0, 0)),
        ),
        compiler_params=pltpu.CompilerParams(
            dimension_semantics=("parallel",),
            vmem_limit_bytes=_vmem_limit_bytes(L, b_blk, D, F, H, f_chunk,
                                               matmul_dtype, x.dtype),
        ),
    )(*args)
    return jnp.transpose(out_nld, (1, 0, 2))


# --------------------------------------------------------------------------- #
# Pure-JAX reference (mirrors the PyTorch forward, f32)
# --------------------------------------------------------------------------- #
def reference_residual_attention_block(x, *, num_heads,
                                       ln1_w, ln1_b, in_proj_w, in_proj_b,
                                       out_proj_w, out_proj_b,
                                       ln2_w, ln2_b, fc_w, fc_b, proj_w, proj_b,
                                       attn_mask=None, ln_eps=1e-5):
    L, N, D = x.shape
    H = num_heads
    hd = D // H

    def ln(v, w, b):
        v32 = v.astype(jnp.float32)
        mu = v32.mean(-1, keepdims=True)
        var = ((v32 - mu) ** 2).mean(-1, keepdims=True)
        return ((v32 - mu) / jnp.sqrt(var + ln_eps) * w + b).astype(v.dtype)

    wq, wk, wv = in_proj_w[:D], in_proj_w[D:2 * D], in_proj_w[2 * D:]
    bq, bk, bv = in_proj_b[:D], in_proj_b[D:2 * D], in_proj_b[2 * D:]

    t = ln(x, ln1_w, ln1_b)
    q = (t @ wq.T + bq) * (hd ** -0.5)
    k = t @ wk.T + bk
    v_ = t @ wv.T + bv

    def split(a):  # (L, N, D) -> (N, H, L, hd)
        return a.reshape(L, N, H, hd).transpose(1, 2, 0, 3)

    qh, kh, vh = split(q), split(k), split(v_)
    s = jnp.einsum('nhqd,nhkd->nhqk', qh, kh)
    if attn_mask is not None:
        s = s + attn_mask
    p = jax.nn.softmax(s, axis=-1)
    o = jnp.einsum('nhqk,nhkd->nhqd', p, vh)
    o = o.transpose(2, 0, 1, 3).reshape(L, N, D)
    x = x + (o @ out_proj_w.T + out_proj_b)

    t2 = ln(x, ln2_w, ln2_b)
    h = t2 @ fc_w.T + fc_b
    h = h * jax.nn.sigmoid(1.702 * h)
    x = x + (h @ proj_w.T + proj_b)
    return x


# --------------------------------------------------------------------------- #
# Self-test
# --------------------------------------------------------------------------- #
if __name__ == "__main__":
    # Small shapes consistent with the module: seq=8, batch=2, d_model=32, heads=4.
    L, N, D, H = 8, 2, 32, 4
    F = 4 * D

    key = jax.random.PRNGKey(0)
    ks = jax.random.split(key, 16)

    x = jax.random.normal(ks[0], (L, N, D), jnp.float32)
    params = dict(
        num_heads=H,
        ln1_w=1.0 + 0.1 * jax.random.normal(ks[1], (D,), jnp.float32),
        ln1_b=0.1 * jax.random.normal(ks[2], (D,), jnp.float32),
        in_proj_w=0.1 * jax.random.normal(ks[3], (3 * D, D), jnp.float32),
        in_proj_b=0.1 * jax.random.normal(ks[4], (3 * D,), jnp.float32),
        out_proj_w=0.1 * jax.random.normal(ks[5], (D, D), jnp.float32),
        out_proj_b=0.1 * jax.random.normal(ks[6], (D,), jnp.float32),
        ln2_w=1.0 + 0.1 * jax.random.normal(ks[7], (D,), jnp.float32),
        ln2_b=0.1 * jax.random.normal(ks[8], (D,), jnp.float32),
        fc_w=0.1 * jax.random.normal(ks[9], (F, D), jnp.float32),
        fc_b=0.1 * jax.random.normal(ks[10], (F,), jnp.float32),
        proj_w=0.1 * jax.random.normal(ks[11], (D, F), jnp.float32),
        proj_b=0.1 * jax.random.normal(ks[12], (D,), jnp.float32),
    )

    # CLIP text-transformer style causal mask (strict upper triangle = -inf).
    causal = jnp.triu(jnp.full((L, L), float("-inf"), jnp.float32), k=1)

    for mask in (None, causal):
        out = residual_attention_block(x, attn_mask=mask, **params)
        out = jax.block_until_ready(out)
        ref = reference_residual_attention_block(x, attn_mask=mask, **params)
        ref = jax.block_until_ready(ref)
        assert out.shape == (L, N, D), out.shape
        # bf16 matmul operands + approx softmax reciprocal vs. an f32 reference:
        # tolerance loosened accordingly (per review).
        np.testing.assert_allclose(np.asarray(out), np.asarray(ref),
                                   rtol=2e-2, atol=2e-2)

    print("KERNEL_OK")
</pallas_src>

<mosaic_0001>
module attributes {stable_mosaic.version = 11 : i64} {
  func.func @_residual_attention_block_kernel(%arg0: i32, %arg1: memref<1x8x32xf32, #tpu.memory_space<vmem>>, %arg2: memref<1x32xf32, #tpu.memory_space<vmem>>, %arg3: memref<1x32xf32, #tpu.memory_space<vmem>>, %arg4: memref<32x96xbf16, #tpu.memory_space<vmem>>, %arg5: memref<1x96xf32, #tpu.memory_space<vmem>>, %arg6: memref<32x32xbf16, #tpu.memory_space<vmem>>, %arg7: memref<1x32xf32, #tpu.memory_space<vmem>>, %arg8: memref<1x32xf32, #tpu.memory_space<vmem>>, %arg9: memref<1x32xf32, #tpu.memory_space<vmem>>, %arg10: memref<32x128xbf16, #tpu.memory_space<vmem>>, %arg11: memref<1x128xf32, #tpu.memory_space<vmem>>, %arg12: memref<128x32xbf16, #tpu.memory_space<vmem>>, %arg13: memref<1x32xf32, #tpu.memory_space<vmem>>, %arg14: memref<1x8x32xf32, #tpu.memory_space<vmem>>) attributes {dimension_semantics = [#tpu.dimension_semantics<parallel>], iteration_bounds = array<i64: 2>, scalar_prefetch = 0 : i64, scratch_operands = 0 : i64, tpu.core_type = #tpu.core_type<tc>, window_params = [{transform_indices = @transform_0, window_bounds = array<i64: 1, 8, 32>}, {pipeline_mode = #tpu.pipeline_mode<synchronous>, transform_indices = @transform_1, window_bounds = array<i64: 1, 32>}, {pipeline_mode = #tpu.pipeline_mode<synchronous>, transform_indices = @transform_2, window_bounds = array<i64: 1, 32>}, {pipeline_mode = #tpu.pipeline_mode<synchronous>, transform_indices = @transform_3, window_bounds = array<i64: 32, 96>}, {pipeline_mode = #tpu.pipeline_mode<synchronous>, transform_indices = @transform_4, window_bounds = array<i64: 1, 96>}, {pipeline_mode = #tpu.pipeline_mode<synchronous>, transform_indices = @transform_5, window_bounds = array<i64: 32, 32>}, {pipeline_mode = #tpu.pipeline_mode<synchronous>, transform_indices = @transform_6, window_bounds = array<i64: 1, 32>}, {pipeline_mode = #tpu.pipeline_mode<synchronous>, transform_indices = @transform_7, window_bounds = array<i64: 1, 32>}, {pipeline_mode = #tpu.pipeline_mode<synchronous>, transform_indices = @transform_8, window_bounds = array<i64: 1, 32>}, {pipeline_mode = #tpu.pipeline_mode<synchronous>, transform_indices = @transform_9, window_bounds = array<i64: 32, 128>}, {pipeline_mode = #tpu.pipeline_mode<synchronous>, transform_indices = @transform_10, window_bounds = array<i64: 1, 128>}, {pipeline_mode = #tpu.pipeline_mode<synchronous>, transform_indices = @transform_11, window_bounds = array<i64: 128, 32>}, {pipeline_mode = #tpu.pipeline_mode<synchronous>, transform_indices = @transform_12, window_bounds = array<i64: 1, 32>}, {transform_indices = @transform_13, window_bounds = array<i64: 1, 8, 32>}]} {
    %c0 = arith.constant 0 : index
    %c0_0 = arith.constant 0 : index
    %c0_1 = arith.constant 0 : index
    %0 = vector.load %arg1[%c0, %c0_0, %c0_1] : memref<1x8x32xf32, #tpu.memory_space<vmem>>, vector<1x8x32xf32>
    %1 = vector.shape_cast %0 : vector<1x8x32xf32> to vector<8x32xf32>
    %cst = arith.constant dense<0.000000e+00> : vector<8xf32>
    %2 = vector.multi_reduction <add>, %1, %cst [1] : vector<8x32xf32> to vector<8xf32>
    %3 = vector.shape_cast %2 : vector<8xf32> to vector<8x1xf32>
    %cst_2 = arith.constant 3.200000e+01 : f32
    %4 = vector.broadcast %cst_2 : f32 to vector<8x1xf32>
    %5 = arith.divf %3, %4 : vector<8x1xf32>
    %6 = vector.broadcast %5 : vector<8x1xf32> to vector<8x32xf32>
    %7 = arith.subf %1, %6 : vector<8x32xf32>
    %8 = arith.mulf %7, %7 : vector<8x32xf32>
    %cst_3 = arith.constant dense<0.000000e+00> : vector<8xf32>
    %9 = vector.multi_reduction <add>, %8, %cst_3 [1] : vector<8x32xf32> to vector<8xf32>
    %10 = vector.shape_cast %9 : vector<8xf32> to vector<8x1xf32>
    %cst_4 = arith.constant 3.200000e+01 : f32
    %11 = vector.broadcast %cst_4 : f32 to vector<8x1xf32>
    %12 = arith.divf %10, %11 : vector<8x1xf32>
    %cst_5 = arith.constant 9.99999974E-6 : f32
    %13 = vector.broadcast %cst_5 : f32 to vector<8x1xf32>
    %14 = arith.addf %12, %13 : vector<8x1xf32>
    %15 = math.rsqrt %14 : vector<8x1xf32>
    %16 = vector.broadcast %15 : vector<8x1xf32> to vector<8x32xf32>
    %17 = arith.mulf %7, %16 : vector<8x32xf32>
    %c0_6 = arith.constant 0 : index
    %c0_7 = arith.constant 0 : index
    %18 = vector.load %arg2[%c0_6, %c0_7] : memref<1x32xf32, #tpu.memory_space<vmem>>, vector<1x32xf32>
    %19 = vector.broadcast %18 : vector<1x32xf32> to vector<8x32xf32>
    %20 = arith.mulf %17, %19 : vector<8x32xf32>
    %c0_8 = arith.constant 0 : index
    %c0_9 = arith.constant 0 : index
    %21 = vector.load %arg3[%c0_8, %c0_9] : memref<1x32xf32, #tpu.memory_space<vmem>>, vector<1x32xf32>
    %22 = vector.broadcast %21 : vector<1x32xf32> to vector<8x32xf32>
    %23 = arith.addf %20, %22 : vector<8x32xf32>
    %24 = arith.truncf %23 : vector<8x32xf32> to vector<8x32xbf16>
    %c0_10 = arith.constant 0 : index
    %c0_11 = arith.constant 0 : index
    %25 = vector.load %arg4[%c0_10, %c0_11] : memref<32x96xbf16, #tpu.memory_space<vmem>>, vector<32x96xbf16>
    %cst_12 = arith.constant dense<0.000000e+00> : vector<8x96xf32>
    %26 = tpu.matmul %24, %25, %cst_12 {dimension_numbers = #tpu.dot_dimension_numbers<[1], [0], [0], [1], [0, 0, 1, 1], [], []>} : vector<8x32xbf16>, vector<32x96xbf16>, vector<8x96xf32> -> vector<8x96xf32>
    %c0_13 = arith.constant 0 : index
    %c0_14 = arith.constant 0 : index
    %27 = vector.load %arg5[%c0_13, %c0_14] : memref<1x96xf32, #tpu.memory_space<vmem>>, vector<1x96xf32>
    %28 = vector.broadcast %27 : vector<1x96xf32> to vector<8x96xf32>
    %29 = arith.addf %26, %28 : vector<8x96xf32>
    %30 = vector.extract_strided_slice %29 {offsets = [0, 0], sizes = [8, 32], strides = [1, 1]} : vector<8x96xf32> to vector<8x32xf32>
    %31 = arith.truncf %30 : vector<8x32xf32> to vector<8x32xbf16>
    %32 = vector.extract_strided_slice %31 {offsets = [0, 0], sizes = [8, 8], strides = [1, 1]} : vector<8x32xbf16> to vector<8x8xbf16>
    %33 = vector.extract_strided_slice %31 {offsets = [0, 8], sizes = [8, 8], strides = [1, 1]} : vector<8x32xbf16> to vector<8x8xbf16>
    %34 = vector.extract_strided_slice %31 {offsets = [0, 16], sizes = [8, 8], strides = [1, 1]} : vector<8x32xbf16> to vector<8x8xbf16>
    %35 = vector.extract_strided_slice %31 {offsets = [0, 24], sizes = [8, 8], strides = [1, 1]} : vector<8x32xbf16> to vector<8x8xbf16>
    %36 = vector.shape_cast %32 : vector<8x8xbf16> to vector<1x8x8xbf16>
    %37 = vector.shape_cast %33 : vector<8x8xbf16> to vector<1x8x8xbf16>
    %38 = vector.shape_cast %34 : vector<8x8xbf16> to vector<1x8x8xbf16>
    %39 = vector.shape_cast %35 : vector<8x8xbf16> to vector<1x8x8xbf16>
    %40 = tpu.concatenate %36, %37, %38, %39 in 0 : vector<1x8x8xbf16>, vector<1x8x8xbf16>, vector<1x8x8xbf16>, vector<1x8x8xbf16> -> vector<4x8x8xbf16>
    %41 = vector.extract_strided_slice %29 {offsets = [0, 32], sizes = [8, 32], strides = [1, 1]} : vector<8x96xf32> to vector<8x32xf32>
    %42 = arith.truncf %41 : vector<8x32xf32> to vector<8x32xbf16>
    %43 = vector.extract_strided_slice %42 {offsets = [0, 0], sizes = [8, 8], strides = [1, 1]} : vector<8x32xbf16> to vector<8x8xbf16>
    %44 = vector.extract_strided_slice %42 {offsets = [0, 8], sizes = [8, 8], strides = [1, 1]} : vector<8x32xbf16> to vector<8x8xbf16>
    %45 = vector.extract_strided_slice %42 {offsets = [0, 16], sizes = [8, 8], strides = [1, 1]} : vector<8x32xbf16> to vector<8x8xbf16>
    %46 = vector.extract_strided_slice %42 {offsets = [0, 24], sizes = [8, 8], strides = [1, 1]} : vector<8x32xbf16> to vector<8x8xbf16>
    %47 = vector.shape_cast %43 : vector<8x8xbf16> to vector<1x8x8xbf16>
    %48 = vector.shape_cast %44 : vector<8x8xbf16> to vector<1x8x8xbf16>
    %49 = vector.shape_cast %45 : vector<8x8xbf16> to vector<1x8x8xbf16>
    %50 = vector.shape_cast %46 : vector<8x8xbf16> to vector<1x8x8xbf16>
    %51 = tpu.concatenate %47, %48, %49, %50 in 0 : vector<1x8x8xbf16>, vector<1x8x8xbf16>, vector<1x8x8xbf16>, vector<1x8x8xbf16> -> vector<4x8x8xbf16>
    %52 = vector.extract_strided_slice %29 {offsets = [0, 64], sizes = [8, 32], strides = [1, 1]} : vector<8x96xf32> to vector<8x32xf32>
    %53 = arith.truncf %52 : vector<8x32xf32> to vector<8x32xbf16>
    %54 = vector.extract_strided_slice %53 {offsets = [0, 0], sizes = [8, 8], strides = [1, 1]} : vector<8x32xbf16> to vector<8x8xbf16>
    %55 = vector.extract_strided_slice %53 {offsets = [0, 8], sizes = [8, 8], strides = [1, 1]} : vector<8x32xbf16> to vector<8x8xbf16>
    %56 = vector.extract_strided_slice %53 {offsets = [0, 16], sizes = [8, 8], strides = [1, 1]} : vector<8x32xbf16> to vector<8x8xbf16>
    %57 = vector.extract_strided_slice %53 {offsets = [0, 24], sizes = [8, 8], strides = [1, 1]} : vector<8x32xbf16> to vector<8x8xbf16>
    %58 = vector.shape_cast %54 : vector<8x8xbf16> to vector<1x8x8xbf16>
    %59 = vector.shape_cast %55 : vector<8x8xbf16> to vector<1x8x8xbf16>
    %60 = vector.shape_cast %56 : vector<8x8xbf16> to vector<1x8x8xbf16>
    %61 = vector.shape_cast %57 : vector<8x8xbf16> to vector<1x8x8xbf16>
    %62 = tpu.concatenate %58, %59, %60, %61 in 0 : vector<1x8x8xbf16>, vector<1x8x8xbf16>, vector<1x8x8xbf16>, vector<1x8x8xbf16> -> vector<4x8x8xbf16>
    "tpu.trace_start"() <{level = 10 : i32, message = "bqe,bke->bqk"}> : () -> ()
    %cst_15 = arith.constant dense<0.000000e+00> : vector<4x8x8xf32>
    %63 = tpu.matmul %40, %51, %cst_15 {dimension_numbers = #tpu.dot_dimension_numbers<[2], [2], [1], [1], [0, 0, 0, 1, 1, 1], [0], [0]>} : vector<4x8x8xbf16>, vector<4x8x8xbf16>, vector<4x8x8xf32> -> vector<4x8x8xf32>
    "tpu.trace_stop"() : () -> ()
    %cst_16 = arith.constant dense<0xFF800000> : vector<4x8xf32>
    %64 = vector.multi_reduction <maximumf>, %63, %cst_16 [2] : vector<4x8x8xf32> to vector<4x8xf32>
    %65 = vector.shape_cast %64 : vector<4x8xf32> to vector<4x8x1xf32>
    %66 = vector.broadcast %65 : vector<4x8x1xf32> to vector<4x8x8xf32>
    %67 = arith.subf %63, %66 : vector<4x8x8xf32>
    %68 = math.exp %67 : vector<4x8x8xf32>
    %cst_17 = arith.constant dense<0.000000e+00> : vector<4x8xf32>
    %69 = vector.multi_reduction <add>, %68, %cst_17 [2] : vector<4x8x8xf32> to vector<4x8xf32>
    %70 = vector.shape_cast %69 : vector<4x8xf32> to vector<4x8x1xf32>
    %71 = tpu.reciprocal %70 {approx = true} : vector<4x8x1xf32> -> vector<4x8x1xf32>
    %72 = vector.broadcast %71 : vector<4x8x1xf32> to vector<4x8x8xf32>
    %73 = arith.mulf %68, %72 : vector<4x8x8xf32>
    %74 = arith.truncf %73 : vector<4x8x8xf32> to vector<4x8x8xbf16>
    "tpu.trace_start"() <{level = 10 : i32, message = "bqk,bke->bqe"}> : () -> ()
    %cst_18 = arith.constant dense<0.000000e+00> : vector<4x8x8xf32>
    %75 = tpu.matmul %74, %62, %cst_18 {dimension_numbers = #tpu.dot_dimension_numbers<[2], [1], [1], [2], [0, 0, 0, 1, 1, 2], [0], [0]>} : vector<4x8x8xbf16>, vector<4x8x8xbf16>, vector<4x8x8xf32> -> vector<4x8x8xf32>
    "tpu.trace_stop"() : () -> ()
    %76 = vector.extract_strided_slice %75 {offsets = [0, 0, 0], sizes = [1, 8, 8], strides = [1, 1, 1]} : vector<4x8x8xf32> to vector<1x8x8xf32>
    %77 = vector.shape_cast %76 : vector<1x8x8xf32> to vector<8x8xf32>
    %78 = vector.extract_strided_slice %75 {offsets = [1, 0, 0], sizes = [1, 8, 8], strides = [1, 1, 1]} : vector<4x8x8xf32> to vector<1x8x8xf32>
    %79 = vector.shape_cast %78 : vector<1x8x8xf32> to vector<8x8xf32>
    %80 = vector.extract_strided_slice %75 {offsets = [2, 0, 0], sizes = [1, 8, 8], strides = [1, 1, 1]} : vector<4x8x8xf32> to vector<1x8x8xf32>
    %81 = vector.shape_cast %80 : vector<1x8x8xf32> to vector<8x8xf32>
    %82 = vector.extract_strided_slice %75 {offsets = [3, 0, 0], sizes = [1, 8, 8], strides = [1, 1, 1]} : vector<4x8x8xf32> to vector<1x8x8xf32>
    %83 = vector.shape_cast %82 : vector<1x8x8xf32> to vector<8x8xf32>
    %84 = tpu.concatenate %77, %79, %81, %83 in 1 : vector<8x8xf32>, vector<8x8xf32>, vector<8x8xf32>, vector<8x8xf32> -> vector<8x32xf32>
    %85 = arith.truncf %84 : vector<8x32xf32> to vector<8x32xbf16>
    %c0_19 = arith.constant 0 : index
    %c0_20 = arith.constant 0 : index
    %86 = vector.load %arg6[%c0_19, %c0_20] : memref<32x32xbf16, #tpu.memory_space<vmem>>, vector<32x32xbf16>
    %cst_21 = arith.constant dense<0.000000e+00> : vector<8x32xf32>
    %87 = tpu.matmul %85, %86, %cst_21 {dimension_numbers = #tpu.dot_dimension_numbers<[1], [0], [0], [1], [0, 0, 1, 1], [], []>} : vector<8x32xbf16>, vector<32x32xbf16>, vector<8x32xf32> -> vector<8x32xf32>
    %c0_22 = arith.constant 0 : index
    %c0_23 = arith.constant 0 : index
    %88 = vector.load %arg7[%c0_22, %c0_23] : memref<1x32xf32, #tpu.memory_space<vmem>>, vector<1x32xf32>
    %89 = vector.broadcast %88 : vector<1x32xf32> to vector<8x32xf32>
    %90 = arith.addf %87, %89 : vector<8x32xf32>
    %91 = arith.addf %1, %90 : vector<8x32xf32>
    %cst_24 = arith.constant dense<0.000000e+00> : vector<8xf32>
    %92 = vector.multi_reduction <add>, %91, %cst_24 [1] : vector<8x32xf32> to vector<8xf32>
    %93 = vector.shape_cast %92 : vector<8xf32> to vector<8x1xf32>
    %cst_25 = arith.constant 3.200000e+01 : f32
    %94 = vector.broadcast %cst_25 : f32 to vector<8x1xf32>
    %95 = arith.divf %93, %94 : vector<8x1xf32>
    %96 = vector.broadcast %95 : vector<8x1xf32> to vector<8x32xf32>
    %97 = arith.subf %91, %96 : vector<8x32xf32>
    %98 = arith.mulf %97, %97 : vector<8x32xf32>
    %cst_26 = arith.constant dense<0.000000e+00> : vector<8xf32>
    %99 = vector.multi_reduction <add>, %98, %cst_26 [1] : vector<8x32xf32> to vector<8xf32>
    %100 = vector.shape_cast %99 : vector<8xf32> to vector<8x1xf32>
    %cst_27 = arith.constant 3.200000e+01 : f32
    %101 = vector.broadcast %cst_27 : f32 to vector<8x1xf32>
    %102 = arith.divf %100, %101 : vector<8x1xf32>
    %cst_28 = arith.constant 9.99999974E-6 : f32
    %103 = vector.broadcast %cst_28 : f32 to vector<8x1xf32>
    %104 = arith.addf %102, %103 : vector<8x1xf32>
    %105 = math.rsqrt %104 : vector<8x1xf32>
    %106 = vector.broadcast %105 : vector<8x1xf32> to vector<8x32xf32>
    %107 = arith.mulf %97, %106 : vector<8x32xf32>
    %c0_29 = arith.constant 0 : index
    %c0_30 = arith.constant 0 : index
    %108 = vector.load %arg8[%c0_29, %c0_30] : memref<1x32xf32, #tpu.memory_space<vmem>>, vector<1x32xf32>
    %109 = vector.broadcast %108 : vector<1x32xf32> to vector<8x32xf32>
    %110 = arith.mulf %107, %109 : vector<8x32xf32>
    %c0_31 = arith.constant 0 : index
    %c0_32 = arith.constant 0 : index
    %111 = vector.load %arg9[%c0_31, %c0_32] : memref<1x32xf32, #tpu.memory_space<vmem>>, vector<1x32xf32>
    %112 = vector.broadcast %111 : vector<1x32xf32> to vector<8x32xf32>
    %113 = arith.addf %110, %112 : vector<8x32xf32>
    %114 = arith.truncf %113 : vector<8x32xf32> to vector<8x32xbf16>
    %cst_33 = arith.constant 0.000000e+00 : f32
    %115 = vector.broadcast %cst_33 : f32 to vector<8x32xf32>
    %c0_34 = arith.constant 0 : index
    %c0_35 = arith.constant 0 : index
    %116 = vector.load %arg10[%c0_34, %c0_35] : memref<32x128xbf16, #tpu.memory_space<vmem>>, vector<32x128xbf16>
    %cst_36 = arith.constant dense<0.000000e+00> : vector<8x128xf32>
    %117 = tpu.matmul %114, %116, %cst_36 {dimension_numbers = #tpu.dot_dimension_numbers<[1], [0], [0], [1], [0, 0, 1, 1], [], []>} : vector<8x32xbf16>, vector<32x128xbf16>, vector<8x128xf32> -> vector<8x128xf32>
    %c0_37 = arith.constant 0 : index
    %c0_38 = arith.constant 0 : index
    %118 = vector.load %arg11[%c0_37, %c0_38] : memref<1x128xf32, #tpu.memory_space<vmem>>, vector<1x128xf32>
    %119 = vector.broadcast %118 : vector<1x128xf32> to vector<8x128xf32>
    %120 = arith.addf %117, %119 : vector<8x128xf32>
    %cst_39 = arith.constant -1.702000e+00 : f32
    %121 = vector.broadcast %cst_39 : f32 to vector<8x128xf32>
    %122 = arith.mulf %121, %120 : vector<8x128xf32>
    %123 = math.exp %122 : vector<8x128xf32>
    %cst_40 = arith.constant 1.000000e+00 : f32
    %124 = vector.broadcast %cst_40 : f32 to vector<8x128xf32>
    %125 = arith.addf %124, %123 : vector<8x128xf32>
    %cst_41 = arith.constant 1.000000e+00 : f32
    %126 = vector.broadcast %cst_41 : f32 to vector<8x128xf32>
    %127 = arith.divf %126, %125 : vector<8x128xf32>
    %128 = arith.mulf %120, %127 : vector<8x128xf32>
    %129 = arith.truncf %128 : vector<8x128xf32> to vector<8x128xbf16>
    %c0_42 = arith.constant 0 : index
    %c0_43 = arith.constant 0 : index
    %130 = vector.load %arg12[%c0_42, %c0_43] : memref<128x32xbf16, #tpu.memory_space<vmem>>, vector<128x32xbf16>
    %cst_44 = arith.constant dense<0.000000e+00> : vector<8x32xf32>
    %131 = tpu.matmul %129, %130, %cst_44 {dimension_numbers = #tpu.dot_dimension_numbers<[1], [0], [0], [1], [0, 0, 1, 1], [], []>} : vector<8x128xbf16>, vector<128x32xbf16>, vector<8x32xf32> -> vector<8x32xf32>
    %132 = arith.addf %115, %131 : vector<8x32xf32>
    %133 = arith.addf %91, %132 : vector<8x32xf32>
    %c0_45 = arith.constant 0 : index
    %c0_46 = arith.constant 0 : index
    %134 = vector.load %arg13[%c0_45, %c0_46] : memref<1x32xf32, #tpu.memory_space<vmem>>, vector<1x32xf32>
    %135 = vector.broadcast %134 : vector<1x32xf32> to vector<8x32xf32>
    %136 = arith.addf %133, %135 : vector<8x32xf32>
    %137 = vector.shape_cast %136 : vector<8x32xf32> to vector<1x8x32xf32>
    %c0_47 = arith.constant 0 : index
    %c0_48 = arith.constant 0 : index
    %c0_49 = arith.constant 0 : index
    %138 = vector.load %arg14[%c0_47, %c0_48, %c0_49] : memref<1x8x32xf32, #tpu.memory_space<vmem>>, vector<1x8x32xf32>
    tpu.vector_store %arg14[%c0_47, %c0_48, %c0_49], %137 {strides = array<i32>} : memref<1x8x32xf32, #tpu.memory_space<vmem>>, vector<1x8x32xf32>,
    return
  }
  func.func @transform_0(%arg0: i32) -> (i32, i32, i32) {
    %c0_i32 = arith.constant 0 : i32
    %c0_i32_0 = arith.constant 0 : i32
    %c0_i32_1 = arith.constant 0 : i32
    return %arg0, %c0_i32, %c0_i32_0 : i32, i32, i32
  }
  func.func @transform_1(%arg0: i32) -> (i32, i32) {
    %c0_i32 = arith.constant 0 : i32
    %c0_i32_0 = arith.constant 0 : i32
    %c0_i32_1 = arith.constant 0 : i32
    return %c0_i32, %c0_i32_0 : i32, i32
  }
  func.func @transform_2(%arg0: i32) -> (i32, i32) {
    %c0_i32 = arith.constant 0 : i32
    %c0_i32_0 = arith.constant 0 : i32
    %c0_i32_1 = arith.constant 0 : i32
    return %c0_i32, %c0_i32_0 : i32, i32
  }
  func.func @transform_3(%arg0: i32) -> (i32, i32) {
    %c0_i32 = arith.constant 0 : i32
    %c0_i32_0 = arith.constant 0 : i32
    %c0_i32_1 = arith.constant 0 : i32
    return %c0_i32, %c0_i32_0 : i32, i32
  }
  func.func @transform_4(%arg0: i32) -> (i32, i32) {
    %c0_i32 = arith.constant 0 : i32
    %c0_i32_0 = arith.constant 0 : i32
    %c0_i32_1 = arith.constant 0 : i32
    return %c0_i32, %c0_i32_0 : i32, i32
  }
  func.func @transform_5(%arg0: i32) -> (i32, i32) {
    %c0_i32 = arith.constant 0 : i32
    %c0_i32_0 = arith.constant 0 : i32
    %c0_i32_1 = arith.constant 0 : i32
    return %c0_i32, %c0_i32_0 : i32, i32
  }
  func.func @transform_6(%arg0: i32) -> (i32, i32) {
    %c0_i32 = arith.constant 0 : i32
    %c0_i32_0 = arith.constant 0 : i32
    %c0_i32_1 = arith.constant 0 : i32
    return %c0_i32, %c0_i32_0 : i32, i32
  }
  func.func @transform_7(%arg0: i32) -> (i32, i32) {
    %c0_i32 = arith.constant 0 : i32
    %c0_i32_0 = arith.constant 0 : i32
    %c0_i32_1 = arith.constant 0 : i32
    return %c0_i32, %c0_i32_0 : i32, i32
  }
  func.func @transform_8(%arg0: i32) -> (i32, i32) {
    %c0_i32 = arith.constant 0 : i32
    %c0_i32_0 = arith.constant 0 : i32
    %c0_i32_1 = arith.constant 0 : i32
    return %c0_i32, %c0_i32_0 : i32, i32
  }
  func.func @transform_9(%arg0: i32) -> (i32, i32) {
    %c0_i32 = arith.constant 0 : i32
    %c0_i32_0 = arith.constant 0 : i32
    %c0_i32_1 = arith.constant 0 : i32
    return %c0_i32, %c0_i32_0 : i32, i32
  }
  func.func @transform_10(%arg0: i32) -> (i32, i32) {
    %c0_i32 = arith.constant 0 : i32
    %c0_i32_0 = arith.constant 0 : i32
    %c0_i32_1 = arith.constant 0 : i32
    return %c0_i32, %c0_i32_0 : i32, i32
  }
  func.func @transform_11(%arg0: i32) -> (i32, i32) {
    %c0_i32 = arith.constant 0 : i32
    %c0_i32_0 = arith.constant 0 : i32
    %c0_i32_1 = arith.constant 0 : i32
    return %c0_i32, %c0_i32_0 : i32, i32
  }
  func.func @transform_12(%arg0: i32) -> (i32, i32) {
    %c0_i32 = arith.constant 0 : i32
    %c0_i32_0 = arith.constant 0 : i32
    %c0_i32_1 = arith.constant 0 : i32
    return %c0_i32, %c0_i32_0 : i32, i32
  }
  func.func @transform_13(%arg0: i32) -> (i32, i32, i32) {
    %c0_i32 = arith.constant 0 : i32
    %c0_i32_0 = arith.constant 0 : i32
    %c0_i32_1 = arith.constant 0 : i32
    return %arg0, %c0_i32, %c0_i32_0 : i32, i32, i32
  }
}

</mosaic_0001>

<llo_original>
// kernel: tpu_custom_call.1
$region0: #{tpu_custom_call.1}
  #allocation0 [shape = 'u32[]', space=smem, size = 0x4, offset = 0x4, fixed_abs, tag = 'smem constant byte address 0x4 - core index']
  #allocation1 [shape = 'u32[144,128]{1,0:T(1,128)}', space=vmem, size = 0x12000, scoped, tag = 'internal scratch']
  %s0 = inlined_call_operand.vmem [shape: f32[2,8,32], index: 0, kind: input, shape index: {}]
  %s1 = inlined_call_operand.vmem [shape: f32[1,32], index: 1, kind: input, shape index: {}]
  %s2 = inlined_call_operand.vmem [shape: f32[1,32], index: 2, kind: input, shape index: {}]
  %s3 = inlined_call_operand.vmem [shape: bf16[32,96], index: 3, kind: input, shape index: {}]
  %s4 = inlined_call_operand.vmem [shape: f32[1,96], index: 4, kind: input, shape index: {}]
  %s5 = inlined_call_operand.vmem [shape: bf16[32,32], index: 5, kind: input, shape index: {}]
  %s6 = inlined_call_operand.vmem [shape: f32[1,32], index: 6, kind: input, shape index: {}]
  %s7 = inlined_call_operand.vmem [shape: f32[1,32], index: 7, kind: input, shape index: {}]
  %s8 = inlined_call_operand.vmem [shape: f32[1,32], index: 8, kind: input, shape index: {}]
  %s9 = inlined_call_operand.vmem [shape: bf16[32,128], index: 9, kind: input, shape index: {}]
  %s10 = inlined_call_operand.vmem [shape: f32[1,128], index: 10, kind: input, shape index: {}]
  %s11 = inlined_call_operand.vmem [shape: bf16[128,32], index: 11, kind: input, shape index: {}]
  %s12 = inlined_call_operand.vmem [shape: f32[1,32], index: 12, kind: input, shape index: {}]
  %s13 = inlined_call_operand.hbm [shape: f32[2,8,32], index: 13, kind: output, shape index: {}]
  %s14 = sld [smem:[#allocation0]]
  $region85: #{tpu_custom_call.1} parent=0
    _
  %s16 = ssub.s32 1, %s14
  %s17 = scalar_select 0, %s16, %s14
  $region1: #{tpu_custom_call.1} parent=0
    #allocation2 [shape = 'u8[8192]{0}', space=vmem, size = 0x2000, scoped, tag = 'output window, operand 0']
    #allocation3 [shape = 's32[2]{0}', space=sflag, size = 0x8, scoped, tag = 'scoped memory for tpu_custom_call.1']
    %18 = vsyncpa [#allocation3], 0
    %s19 = scalar_lea.sflag [#allocation3], 1
    %20 = vsyncpa %s19, 0
    loop: start=0, step=1, limit=4
    $region2: #{tpu_custom_call.1} parent=1 // loop_pre_header
      _
    $region3: #{tpu_custom_call.1} parent=1 // loop_header
      %s22 = sphi 0, %s26
      %p23 = scmp.ge.s32.totalorder %s22, 4
      %s32 = sphi 0, %s34
      %s35 = sphi 0, %s32
      %s36 = sphi 0, %s35
      %s52 = sphi 0, %s36
      %s56 = sphi 0, %s56
      %s58 = sphi 0, %s56
      %s59 = sphi 0, %s58
      %s73 = sphi 0, %s59
      %s77 = sphi 0, %s77
      %s79 = sphi 0, %s77
      %s80 = sphi 0, %s79
      %s94 = sphi 0, %s80
      %s98 = sphi 0, %s98
      %s100 = sphi 0, %s98
      %s101 = sphi 0, %s100
      %s115 = sphi 0, %s101
      %s119 = sphi 0, %s119
      %s121 = sphi 0, %s119
      %s122 = sphi 0, %s121
      %s136 = sphi 0, %s122
      %s140 = sphi 0, %s140
      %s142 = sphi 0, %s140
      %s143 = sphi 0, %s142
      %s157 = sphi 0, %s143
      %s161 = sphi 0, %s161
      %s163 = sphi 0, %s161
      %s164 = sphi 0, %s163
      %s178 = sphi 0, %s164
      %s182 = sphi 0, %s182
      %s184 = sphi 0, %s182
      %s185 = sphi 0, %s184
      %s199 = sphi 0, %s185
      %s203 = sphi 0, %s203
      %s205 = sphi 0, %s203
      %s206 = sphi 0, %s205
      %s220 = sphi 0, %s206
      %s224 = sphi 0, %s224
      %s226 = sphi 0, %s224
      %s227 = sphi 0, %s226
      %s241 = sphi 0, %s227
      %s245 = sphi 0, %s245
      %s247 = sphi 0, %s245
      %s248 = sphi 0, %s247
      %s262 = sphi 0, %s248
      %s266 = sphi 0, %s266
      %s268 = sphi 0, %s266
      %s269 = sphi 0, %s268
      %s283 = sphi 0, %s269
      %s287 = sphi 0, %s287
      %s289 = sphi 0, %s287
      %s290 = sphi 0, %s289
      %s304 = sphi 0, %s290
      %s310 = sphi 0, %s312
      %s313 = sphi 0, %s310
      %s314 = sphi 0, %s313
      %s330 = sphi 0, %s314
    $region4: #{tpu_custom_call.1} parent=1 // loop_header_branch
      %25 = sbr.rel (%p23) target = $region8
    $region5: #{tpu_custom_call.1} parent=1 // loop_body
      %s27 = ssub.s32 %s22, 1
      %s28 = ssub.s32 %s22, 2
      %s29 = sadd.s32 %s22, 1
      %s30 = ssub.s32 %s22, %s29
      %p31 = scmp.eq.s32.totalorder %s30, 0
      %s33 = sadd.s32 %s32, 1
      %s34 = scalar_select %p31, %s32, %s33
      %p37 = pneg %p31
      %p38 = scmp.eq.s32.totalorder %s22, 1
      %p39 = por %p37, %p38
      %p40 = scmp.ne.s32.totalorder %s32, %s35
      %p41 = scmp.eq.s32.totalorder %s22, 0
      %p42 = por %p40, %p41
      %p43 = scmp.ne.s32.totalorder %s32, %s35
      %p44 = scmp.eq.s32.totalorder %s27, 1
      %p45 = por %p43, %p44
      %p46 = scmp.ne.s32.totalorder %s35, %s36
      %p47 = scmp.eq.s32.totalorder %s27, 0
      %p48 = por %p46, %p47
      %p49 = scmp.ne.s32.totalorder %s35, %s36
      %p50 = scmp.eq.s32.totalorder %s28, 1
      %p51 = por %p49, %p50
      %p53 = scmp.ne.s32.totalorder %s36, %s52
      %p54 = scmp.eq.s32.totalorder %s28, 0
      %p55 = por %p53, %p54
      %s57 = sadd.s32 %s56, 1
      %p60 = scmp.eq.s32.totalorder %s22, 1
      %p61 = scmp.ne.s32.totalorder %s56, %s58
      %p62 = scmp.eq.s32.totalorder %s22, 0
      %p63 = por %p61, %p62
      %p64 = scmp.ne.s32.totalorder %s56, %s58
      %p65 = scmp.eq.s32.totalorder %s27, 1
      %p66 = por %p64, %p65
      %p67 = scmp.ne.s32.totalorder %s58, %s59
      %p68 = scmp.eq.s32.totalorder %s27, 0
      %p69 = por %p67, %p68
      %p70 = scmp.ne.s32.totalorder %s58, %s59
      %p71 = scmp.eq.s32.totalorder %s28, 1
      %p72 = por %p70, %p71
      %p74 = scmp.ne.s32.totalorder %s59, %s73
      %p75 = scmp.eq.s32.totalorder %s28, 0
      %p76 = por %p74, %p75
      %s78 = sadd.s32 %s77, 1
      %p81 = scmp.eq.s32.totalorder %s22, 1
      %p82 = scmp.ne.s32.totalorder %s77, %s79
      %p83 = scmp.eq.s32.totalorder %s22, 0
      %p84 = por %p82, %p83
      %p85 = scmp.ne.s32.totalorder %s77, %s79
      %p86 = scmp.eq.s32.totalorder %s27, 1
      %p87 = por %p85, %p86
      %p88 = scmp.ne.s32.totalorder %s79, %s80
      %p89 = scmp.eq.s32.totalorder %s27, 0
      %p90 = por %p88, %p89
      %p91 = scmp.ne.s32.totalorder %s79, %s80
      %p92 = scmp.eq.s32.totalorder %s28, 1
      %p93 = por %p91, %p92
      %p95 = scmp.ne.s32.totalorder %s80, %s94
      %p96 = scmp.eq.s32.totalorder %s28, 0
      %p97 = por %p95, %p96
      %s99 = sadd.s32 %s98, 1
      %p102 = scmp.eq.s32.totalorder %s22, 1
      %p103 = scmp.ne.s32.totalorder %s98, %s100
      %p104 = scmp.eq.s32.totalorder %s22, 0
      %p105 = por %p103, %p104
      %p106 = scmp.ne.s32.totalorder %s98, %s100
      %p107 = scmp.eq.s32.totalorder %s27, 1
      %p108 = por %p106, %p107
      %p109 = scmp.ne.s32.totalorder %s100, %s101
      %p110 = scmp.eq.s32.totalorder %s27, 0
      %p111 = por %p109, %p110
      %p112 = scmp.ne.s32.totalorder %s100, %s101
      %p113 = scmp.eq.s32.totalorder %s28, 1
      %p114 = por %p112, %p113
      %p116 = scmp.ne.s32.totalorder %s101, %s115
      %p117 = scmp.eq.s32.totalorder %s28, 0
      %p118 = por %p116, %p117
      %s120 = sadd.s32 %s119, 1
      %p123 = scmp.eq.s32.totalorder %s22, 1
      %p124 = scmp.ne.s32.totalorder %s119, %s121
      %p125 = scmp.eq.s32.totalorder %s22, 0
      %p126 = por %p124, %p125
      %p127 = scmp.ne.s32.totalorder %s119, %s121
      %p128 = scmp.eq.s32.totalorder %s27, 1
      %p129 = por %p127, %p128
      %p130 = scmp.ne.s32.totalorder %s121, %s122
      %p131 = scmp.eq.s32.totalorder %s27, 0
      %p132 = por %p130, %p131
      %p133 = scmp.ne.s32.totalorder %s121, %s122
      %p134 = scmp.eq.s32.totalorder %s28, 1
      %p135 = por %p133, %p134
      %p137 = scmp.ne.s32.totalorder %s122, %s136
      %p138 = scmp.eq.s32.totalorder %s28, 0
      %p139 = por %p137, %p138
      %s141 = sadd.s32 %s140, 1
      %p144 = scmp.eq.s32.totalorder %s22, 1
      %p145 = scmp.ne.s32.totalorder %s140, %s142
      %p146 = scmp.eq.s32.totalorder %s22, 0
      %p147 = por %p145, %p146
      %p148 = scmp.ne.s32.totalorder %s140, %s142
      %p149 = scmp.eq.s32.totalorder %s27, 1
      %p150 = por %p148, %p149
      %p151 = scmp.ne.s32.totalorder %s142, %s143
      %p152 = scmp.eq.s32.totalorder %s27, 0
      %p153 = por %p151, %p152
      %p154 = scmp.ne.s32.totalorder %s142, %s143
      %p155 = scmp.eq.s32.totalorder %s28, 1
      %p156 = por %p154, %p155
      %p158 = scmp.ne.s32.totalorder %s143, %s157
      %p159 = scmp.eq.s32.totalorder %s28, 0
      %p160 = por %p158, %p159
      %s162 = sadd.s32 %s161, 1
      %p165 = scmp.eq.s32.totalorder %s22, 1
      %p166 = scmp.ne.s32.totalorder %s161, %s163
      %p167 = scmp.eq.s32.totalorder %s22, 0
      %p168 = por %p166, %p167
      %p169 = scmp.ne.s32.totalorder %s161, %s163
      %p170 = scmp.eq.s32.totalorder %s27, 1
      %p171 = por %p169, %p170
      %p172 = scmp.ne.s32.totalorder %s163, %s164
      %p173 = scmp.eq.s32.totalorder %s27, 0
      %p174 = por %p172, %p173
      %p175 = scmp.ne.s32.totalorder %s163, %s164
      %p176 = scmp.eq.s32.totalorder %s28, 1
      %p177 = por %p175, %p176
      %p179 = scmp.ne.s32.totalorder %s164, %s178
      %p180 = scmp.eq.s32.totalorder %s28, 0
      %p181 = por %p179, %p180
      %s183 = sadd.s32 %s182, 1
      %p186 = scmp.eq.s32.totalorder %s22, 1
      %p187 = scmp.ne.s32.totalorder %s182, %s184
      %p188 = scmp.eq.s32.totalorder %s22, 0
      %p189 = por %p187, %p188
      %p190 = scmp.ne.s32.totalorder %s182, %s184
      %p191 = scmp.eq.s32.totalorder %s27, 1
      %p192 = por %p190, %p191
      %p193 = scmp.ne.s32.totalorder %s184, %s185
      %p194 = scmp.eq.s32.totalorder %s27, 0
      %p195 = por %p193, %p194
      %p196 = scmp.ne.s32.totalorder %s184, %s185
      %p197 = scmp.eq.s32.totalorder %s28, 1
      %p198 = por %p196, %p197
      %p200 = scmp.ne.s32.totalorder %s185, %s199
      %p201 = scmp.eq.s32.totalorder %s28, 0
      %p202 = por %p200, %p201
      %s204 = sadd.s32 %s203, 1
      %p207 = scmp.eq.s32.totalorder %s22, 1
      %p208 = scmp.ne.s32.totalorder %s203, %s205
      %p209 = scmp.eq.s32.totalorder %s22, 0
      %p210 = por %p208, %p209
      %p211 = scmp.ne.s32.totalorder %s203, %s205
      %p212 = scmp.eq.s32.totalorder %s27, 1
      %p213 = por %p211, %p212
      %p214 = scmp.ne.s32.totalorder %s205, %s206
      %p215 = scmp.eq.s32.totalorder %s27, 0
      %p216 = por %p214, %p215
      %p217 = scmp.ne.s32.totalorder %s205, %s206
      %p218 = scmp.eq.s32.totalorder %s28, 1
      %p219 = por %p217, %p218
      %p221 = scmp.ne.s32.totalorder %s206, %s220
      %p222 = scmp.eq.s32.totalorder %s28, 0
      %p223 = por %p221, %p222
      %s225 = sadd.s32 %s224, 1
      %p228 = scmp.eq.s32.totalorder %s22, 1
      %p229 = scmp.ne.s32.totalorder %s224, %s226
      %p230 = scmp.eq.s32.totalorder %s22, 0
      %p231 = por %p229, %p230
      %p232 = scmp.ne.s32.totalorder %s224, %s226
      %p233 = scmp.eq.s32.totalorder %s27, 1
      %p234 = por %p232, %p233
      %p235 = scmp.ne.s32.totalorder %s226, %s227
      %p236 = scmp.eq.s32.totalorder %s27, 0
      %p237 = por %p235, %p236
      %p238 = scmp.ne.s32.totalorder %s226, %s227
      %p239 = scmp.eq.s32.totalorder %s28, 1
      %p240 = por %p238, %p239
      %p242 = scmp.ne.s32.totalorder %s227, %s241
      %p243 = scmp.eq.s32.totalorder %s28, 0
      %p244 = por %p242, %p243
      %s246 = sadd.s32 %s245, 1
      %p249 = scmp.eq.s32.totalorder %s22, 1
      %p250 = scmp.ne.s32.totalorder %s245, %s247
      %p251 = scmp.eq.s32.totalorder %s22, 0
      %p252 = por %p250, %p251
      %p253 = scmp.ne.s32.totalorder %s245, %s247
      %p254 = scmp.eq.s32.totalorder %s27, 1
      %p255 = por %p253, %p254
      %p256 = scmp.ne.s32.totalorder %s247, %s248
      %p257 = scmp.eq.s32.totalorder %s27, 0
      %p258 = por %p256, %p257
      %p259 = scmp.ne.s32.totalorder %s247, %s248
      %p260 = scmp.eq.s32.totalorder %s28, 1
      %p261 = por %p259, %p260
      %p263 = scmp.ne.s32.totalorder %s248, %s262
      %p264 = scmp.eq.s32.totalorder %s28, 0
      %p265 = por %p263, %p264
      %s267 = sadd.s32 %s266, 1
      %p270 = scmp.eq.s32.totalorder %s22, 1
      %p271 = scmp.ne.s32.totalorder %s266, %s268
      %p272 = scmp.eq.s32.totalorder %s22, 0
      %p273 = por %p271, %p272
      %p274 = scmp.ne.s32.totalorder %s266, %s268
      %p275 = scmp.eq.s32.totalorder %s27, 1
      %p276 = por %p274, %p275
      %p277 = scmp.ne.s32.totalorder %s268, %s269
      %p278 = scmp.eq.s32.totalorder %s27, 0
      %p279 = por %p277, %p278
      %p280 = scmp.ne.s32.totalorder %s268, %s269
      %p281 = scmp.eq.s32.totalorder %s28, 1
      %p282 = por %p280, %p281
      %p284 = scmp.ne.s32.totalorder %s269, %s283
      %p285 = scmp.eq.s32.totalorder %s28, 0
      %p286 = por %p284, %p285
      %s288 = sadd.s32 %s287, 1
      %p291 = scmp.eq.s32.totalorder %s22, 1
      %p292 = scmp.ne.s32.totalorder %s287, %s289
      %p293 = scmp.eq.s32.totalorder %s22, 0
      %p294 = por %p292, %p293
      %p295 = scmp.ne.s32.totalorder %s287, %s289
      %p296 = scmp.eq.s32.totalorder %s27, 1
      %p297 = por %p295, %p296
      %p298 = scmp.ne.s32.totalorder %s289, %s290
      %p299 = scmp.eq.s32.totalorder %s27, 0
      %p300 = por %p298, %p299
      %p301 = scmp.ne.s32.totalorder %s289, %s290
      %p302 = scmp.eq.s32.totalorder %s28, 1
      %p303 = por %p301, %p302
      %p305 = scmp.ne.s32.totalorder %s290, %s304
      %p306 = scmp.eq.s32.totalorder %s28, 0
      %p307 = por %p305, %p306
      %s308 = ssub.s32 %s22, %s29
      %p309 = scmp.eq.s32.totalorder %s308, 0
      %s311 = sadd.s32 %s310, 1
      %s312 = scalar_select %p309, %s310, %s311
      %p315 = pneg %p309
      %p316 = scmp.eq.s32.totalorder %s22, 1
      %p317 = por %p315, %p316
      %p318 = scmp.ne.s32.totalorder %s310, %s313
      %p319 = scmp.eq.s32.totalorder %s22, 0
      %p320 = por %p318, %p319
      %p321 = scmp.ne.s32.totalorder %s310, %s313
      %p322 = scmp.eq.s32.totalorder %s27, 1
      %p323 = por %p321, %p322
      %p324 = scmp.ne.s32.totalorder %s313, %s314
      %p325 = scmp.eq.s32.totalorder %s27, 0
      %p326 = por %p324, %p325
      %p327 = scmp.ne.s32.totalorder %s313, %s314
      %p328 = scmp.eq.s32.totalorder %s28, 1
      %p329 = por %p327, %p328
      %p331 = scmp.ne.s32.totalorder %s314, %s330
      %p332 = scmp.eq.s32.totalorder %s28, 0
      %p333 = por %p331, %p332
      %p334 = scmp.le.s32.totalorder 1, %s22
      %p335 = scmp.lt.s32.totalorder %s22, 3
      %p336 = pnand %p334, %p335
      %p337 = pneg %p336
      // Predicated region
      $region9: #{tpu_custom_call.1} parent=5 // pred_check
        _
      $region10: #{tpu_custom_call.1} parent=5 // pred_check_branch
        %339 = sbr.rel (%p336) target = $region12
      $region11: #{tpu_custom_call.1} parent=5 // pred_region
        %s340 = ssub.s32 %s22, 1
        // Predicated region
        $region13: #{tpu_custom_call.1} parent=11 // pred_check
          %p341 = pneg %p69
        $region14: #{tpu_custom_call.1} parent=11 // pred_check_branch
          %343 = sbr.rel (%p341) target = $region16
        $region15: #{tpu_custom_call.1} parent=11 // pred_region
          _
        $region16: #{tpu_custom_call.1} parent=11 // pred_fallthru
          _
        // Predicated region
        $region17: #{tpu_custom_call.1} parent=11 // pred_check
          %p344 = pneg %p90
        $region18: #{tpu_custom_call.1} parent=11 // pred_check_branch
          %346 = sbr.rel (%p344) target = $region20
        $region19: #{tpu_custom_call.1} parent=11 // pred_region
          _
        $region20: #{tpu_custom_call.1} parent=11 // pred_fallthru
          _
        // Predicated region
        $region21: #{tpu_custom_call.1} parent=11 // pred_check
          %p347 = pneg %p111
        $region22: #{tpu_custom_call.1} parent=11 // pred_check_branch
          %349 = sbr.rel (%p347) target = $region24
        $region23: #{tpu_custom_call.1} parent=11 // pred_region
          _
        $region24: #{tpu_custom_call.1} parent=11 // pred_fallthru
          _
        // Predicated region
        $region25: #{tpu_custom_call.1} parent=11 // pred_check
          %p350 = pneg %p132
        $region26: #{tpu_custom_call.1} parent=11 // pred_check_branch
          %352 = sbr.rel (%p350) target = $region28
        $region27: #{tpu_custom_call.1} parent=11 // pred_region
          _
        $region28: #{tpu_custom_call.1} parent=11 // pred_fallthru
          _
        // Predicated region
        $region29: #{tpu_custom_call.1} parent=11 // pred_check
          %p353 = pneg %p153
        $region30: #{tpu_custom_call.1} parent=11 // pred_check_branch
          %355 = sbr.rel (%p353) target = $region32
        $region31: #{tpu_custom_call.1} parent=11 // pred_region
          _
        $region32: #{tpu_custom_call.1} parent=11 // pred_fallthru
          _
        // Predicated region
        $region33: #{tpu_custom_call.1} parent=11 // pred_check
          %p356 = pneg %p174
        $region34: #{tpu_custom_call.1} parent=11 // pred_check_branch
          %358 = sbr.rel (%p356) target = $region36
        $region35: #{tpu_custom_call.1} parent=11 // pred_region
          _
        $region36: #{tpu_custom_call.1} parent=11 // pred_fallthru
          _
        // Predicated region
        $region37: #{tpu_custom_call.1} parent=11 // pred_check
          %p359 = pneg %p195
        $region38: #{tpu_custom_call.1} parent=11 // pred_check_branch
          %361 = sbr.rel (%p359) target = $region40
        $region39: #{tpu_custom_call.1} parent=11 // pred_region
          _
        $region40: #{tpu_custom_call.1} parent=11 // pred_fallthru
          _
        // Predicated region
        $region41: #{tpu_custom_call.1} parent=11 // pred_check
          %p362 = pneg %p216
        $region42: #{tpu_custom_call.1} parent=11 // pred_check_branch
          %364 = sbr.rel (%p362) target = $region44
        $region43: #{tpu_custom_call.1} parent=11 // pred_region
          _
        $region44: #{tpu_custom_call.1} parent=11 // pred_fallthru
          _
        // Predicated region
        $region45: #{tpu_custom_call.1} parent=11 // pred_check
          %p365 = pneg %p237
        $region46: #{tpu_custom_call.1} parent=11 // pred_check_branch
          %367 = sbr.rel (%p365) target = $region48
        $region47: #{tpu_custom_call.1} parent=11 // pred_region
          _
        $region48: #{tpu_custom_call.1} parent=11 // pred_fallthru
          _
        // Predicated region
        $region49: #{tpu_custom_call.1} parent=11 // pred_check
          %p368 = pneg %p258
        $region50: #{tpu_custom_call.1} parent=11 // pred_check_branch
          %370 = sbr.rel (%p368) target = $region52
        $region51: #{tpu_custom_call.1} parent=11 // pred_region
          _
        $region52: #{tpu_custom_call.1} parent=11 // pred_fallthru
          _
        // Predicated region
        $region53: #{tpu_custom_call.1} parent=11 // pred_check
          %p371 = pneg %p279
        $region54: #{tpu_custom_call.1} parent=11 // pred_check_branch
          %373 = sbr.rel (%p371) target = $region56
        $region55: #{tpu_custom_call.1} parent=11 // pred_region
          _
        $region56: #{tpu_custom_call.1} parent=11 // pred_fallthru
          _
        // Predicated region
        $region57: #{tpu_custom_call.1} parent=11 // pred_check
          %p374 = pneg %p300
        $region58: #{tpu_custom_call.1} parent=11 // pred_check_branch
          %376 = sbr.rel (%p374) target = $region60
        $region59: #{tpu_custom_call.1} parent=11 // pred_region
          _
        $region60: #{tpu_custom_call.1} parent=11 // pred_fallthru
          _
      $region12: #{tpu_custom_call.1} parent=5 // pred_fallthru
        _
      %p377 = scmp.lt.s32.totalorder %s22, 2
      // Predicated region
      $region61: #{tpu_custom_call.1} parent=5 // pred_check
        %p378 = pneg %p377
      $region62: #{tpu_custom_call.1} parent=5 // pred_check_branch
        %380 = sbr.rel (%p378) target = $region64
      $region63: #{tpu_custom_call.1} parent=5 // pred_region
        // Predicated region
        $region65: #{tpu_custom_call.1} parent=63 // pred_check
          %p381 = pneg %p42
        $region66: #{tpu_custom_call.1} parent=63 // pred_check_branch
          %383 = sbr.rel (%p381) target = $region68
        $region67: #{tpu_custom_call.1} parent=63 // pred_region
          %p384 = scmp.lt.s32.totalorder %s22, 1
          %s385 = scalar_select %p384, %s22, 1
          %s386 = smul.addr %s385, 8
          %s387 = scalar_lea.vmem %s0, %s386
        $region68: #{tpu_custom_call.1} parent=63 // pred_fallthru
          _
      $region64: #{tpu_custom_call.1} parent=5 // pred_fallthru
        _
      %p388 = scmp.le.s32.totalorder 1, %s22
      %p389 = scmp.lt.s32.totalorder %s22, 3
      %p390 = pnand %p388, %p389
      %p391 = pneg %p390
      // Predicated region
      $region69: #{tpu_custom_call.1} parent=5 // pred_check
        _
      $region70: #{tpu_custom_call.1} parent=5 // pred_check_branch
        %393 = sbr.rel (%p390) target = $region72
      $region71: #{tpu_custom_call.1} parent=5 // pred_region
        %s394 = ssub.s32 %s22, 1
        %p395 = scmp.lt.s32.totalorder %s27, 1
        %s396 = scalar_select %p395, %s27, 1
        %s397 = smul.addr %s396, 8
        %s398 = scalar_lea.vmem %s0, %s397
        %p399 = pneg %p48
        %p400 = pneg %p45
        %p401 = pneg %p69
        %p402 = pneg %p66
        %p403 = pneg %p90
        %p404 = pneg %p87
        %p405 = pneg %p111
        %p406 = pneg %p108
        %p407 = pneg %p132
        %p408 = pneg %p129
        %p409 = pneg %p153
        %p410 = pneg %p150
        %p411 = pneg %p174
        %p412 = pneg %p171
        %p413 = pneg %p195
        %p414 = pneg %p192
        %p415 = pneg %p216
        %p416 = pneg %p213
        %p417 = pneg %p237
        %p418 = pneg %p234
        %p419 = pneg %p258
        %p420 = pneg %p255
        %p421 = pneg %p279
        %p422 = pneg %p276
        %p423 = pneg %p300
        %p424 = pneg %p297
        %p425 = pneg %p326
        %p426 = pneg %p323
        %s427 = sand.u32 %s313, 1
        %s428 = scalar_lea.sflag [#allocation3], %s427
        %s429 = sand.u32 %s313, 1
        %s430 = smul.addr %s429, 8
        %s431 = scalar_lea.vmem [#allocation2], %s430
        %p432 = scmp.lt.s32.totalorder %s27, 1
        %s433 = scalar_select %p432, %s27, 1
        %s434 = smul.addr %s433, 8
        %s435 = scalar_lea.vmem %s0, %s434
        %v437 = vld [vmem:[%s435] sm:$0xff]
        %vm438 = vcmask 261120
        %v439 = vsel %vm438, %v437, 0.0
        %440 = vadd.xlane.f32.xlu0 %v439
        %v441 = vpop.xlane.xlu0 %440
        %v442 = vrcp.pop 32.0
        %v443 = vmul.f32 %v441, %v442
        %v444 = vsub.f32 %v437, %v443
        %v445 = vmul.f32 %v444, %v444
        %v446 = vsel %vm438, %v445, 0.0
        %447 = vadd.xlane.f32.xlu0 %v446
        %v448 = vpop.xlane.xlu0 %447
        %v449 = vmul.f32 %v448, %v442
        %v450 = vadd.f32 %v449, 1e-05
        %v451 = vrsqrt.pop %v450
        %v452 = vmul.f32 %v444, %v451
        %v453 = vld [vmem:[%s1] sm:$0x1]
        %v455 = vlaneseq
        %v456 = vshrl.u32 %v455, 7
        %v457 = vsub.s32 0, %v456
        %v458 = vrot.slane %v453, %v457
        %v460 = vmul.f32 %v452, %v458
        %v461 = vld [vmem:[%s2] sm:$0x1]
        %v463 = vlaneseq
        %v464 = vshrl.u32 %v463, 7
        %v465 = vsub.s32 0, %v464
        %v466 = vrot.slane %v461, %v465
        %v468 = vadd.f32 %v460, %v466
        %v469 = vpack.c.bf16 %v468, %v468
        %v470 = vld [vmem:[%s3] sm:$0xf]
        %v471 = vld [vmem:[%s3 + $0x4] sm:$0xf]
        %v472 = vld [vmem:[%s3 + $0x8] sm:$0xf]
        %v473 = vld [vmem:[%s3 + $0xc] sm:$0xf]
        %v474 = vld [vmem:[%s4] sm:$0x1]
        %v476 = vlaneseq
        %v477 = vshrl.u32 %v476, 7
        %v478 = vsub.s32 0, %v477
        %v479 = vrot.slane %v474, %v478
        %v485 = vunpack.c.l.b16 %v470
        %v486 = vunpack.c.l.b16 %v471
        %v487 = vunpack.c.l.b16 %v472
        %v488 = vunpack.c.l.b16 %v473
        %v489 = vpack.c.b16 %v486, %v485
        %v490 = vpack.c.b16 %v488, %v487
        %v494 = vsel %vm438, %v469, 0
        %496 = vmatprep.subr.bf16.mxu0 0
        %497 = vmatpush1.bf16.msra.mxu0 %v489
        %498 = vmatprep.subr.bf16.mxu0 0
        %499 = vmatpush1.bf16.msra.mxu0 %v490
        %500 = vmatprep.subr.bf16.mxu0 0
        %501 = vmatpush1.bf16.msra.mxu0 0
        %502 = vmatprep.subr.bf16.mxu0 0
        %503 = vmatpush1.bf16.msra.mxu0 0
        %504 = vmatprep.subr.bf16.mxu0 0
        %505 = vmatpush1.bf16.msra.mxu0 0
        %506 = vmatprep.subr.bf16.mxu0 0
        %507 = vmatpush1.bf16.msra.mxu0 0
        %508 = vmatprep.subr.bf16.mxu0 0
        %509 = vmatpush1.bf16.msra.mxu0 0
        %510 = vmatprep.subr.bf16.mxu0 0
        %511 = vmatpush1.bf16.msra.mxu0 0
        %512 = vmatprep.subr.bf16.mxu0 0
        %513 = vmatpush1.bf16.msra.mxu0 0
        %514 = vmatprep.subr.bf16.mxu0 0
        %515 = vmatpush1.bf16.msra.mxu0 0
        %516 = vmatprep.subr.bf16.mxu0 0
        %517 = vmatpush1.bf16.msra.mxu0 0
        %518 = vmatprep.subr.bf16.mxu0 0
        %519 = vmatpush1.bf16.msra.mxu0 0
        %520 = vmatprep.subr.bf16.mxu0 0
        %521 = vmatpush1.bf16.msra.mxu0 0
        %522 = vmatprep.subr.bf16.mxu0 0
        %523 = vmatpush1.bf16.msra.mxu0 0
        %524 = vmatprep.subr.bf16.mxu0 0
        %525 = vmatpush1.bf16.msra.mxu0 0
        %526 = vmatprep.subr.bf16.mxu0 0
        %527 = vmatpush1.bf16.msra.mxu0 0
        %528 = vmatprep.mubr.bf16.mxu0 0
        %529 = vmatmul.mubr.bf16.gmra.mrb[0].mxu0 %v494
        %v530 = vpop.f32.mrb[0].mxu0
        %v531 = vadd.f32 %v479, %v530
        %v532 = vpop.f32.mrb[0].mxu0
        %v533 = vpop.f32.mrb[0].mxu0
        %v534 = vpop.f32.mrb[0].mxu0
        %535 = vdwg.mxu0
        %v536 = vpack.c.bf16 %v531, %v531
        %538 = vrot.lane.b32.xlu0 %v536, 120
        %v539 = vpop.permute.xlu0 %538
        %540 = vrot.lane.b32.xlu0 %v536, 112
        %v541 = vpop.permute.xlu0 %540
        %542 = vrot.lane.b32.xlu0 %v536, 104
        %v543 = vpop.permute.xlu0 %542
        %544 = vrot.lane.b32.xlu0 %v536, 96
        %v545 = vpop.permute.xlu0 %544
        %vm546 = vcmask 64512
        %v548 = vsel %vm546, %v536, 0
        %v551 = vsel %vm546, %v545, 0
        %553 = vmatprep.subr.bf16.mxu0 0
        %554 = vmatpush1.bf16.xpose.msra.mxu0 %v551
        %555 = vmatprep.subr.bf16.mxu0 0
        %556 = vmatpush1.bf16.xpose.msra.mxu0 0
        %557 = vmatprep.subr.bf16.mxu0 0
        %558 = vmatpush1.bf16.xpose.msra.mxu0 0
        %559 = vmatprep.subr.bf16.mxu0 0
        %560 = vmatpush1.bf16.xpose.msra.mxu0 0
        %561 = vmatprep.subr.bf16.mxu0 0
        %562 = vmatpush1.bf16.xpose.msra.mxu0 0
        %563 = vmatprep.subr.bf16.mxu0 0
        %564 = vmatpush1.bf16.xpose.msra.mxu0 0
        %565 = vmatprep.subr.bf16.mxu0 0
        %566 = vmatpush1.bf16.xpose.msra.mxu0 0
        %567 = vmatprep.subr.bf16.mxu0 0
        %568 = vmatpush1.bf16.xpose.msra.mxu0 0
        %569 = vmatprep.subr.bf16.mxu0 0
        %570 = vmatpush1.bf16.xpose.msra.mxu0 0
        %571 = vmatprep.subr.bf16.mxu0 0
        %572 = vmatpush1.bf16.xpose.msra.mxu0 0
        %573 = vmatprep.subr.bf16.mxu0 0
        %574 = vmatpush1.bf16.xpose.msra.mxu0 0
        %575 = vmatprep.subr.bf16.mxu0 0
        %576 = vmatpush1.bf16.xpose.msra.mxu0 0
        %577 = vmatprep.subr.bf16.mxu0 0
        %578 = vmatpush1.bf16.xpose.msra.mxu0 0
        %579 = vmatprep.subr.bf16.mxu0 0
        %580 = vmatpush1.bf16.xpose.msra.mxu0 0
        %581 = vmatprep.subr.bf16.mxu0 0
        %582 = vmatpush1.bf16.xpose.msra.mxu0 0
        %583 = vmatprep.subr.bf16.mxu0 0
        %584 = vmatpush1.bf16.xpose.msra.mxu0 0
        %585 = vmatprep.mubr.bf16.mxu0 0
        %586 = vmatmul.mubr.bf16.gmra.mrb[0].mxu0 %v548
        %v587 = vpop.f32.mrb[0].mxu0
        %v588 = vadd.f32 0.0, %v587
        %v589 = vpop.f32.mrb[0].mxu0
        %v590 = vpop.f32.mrb[0].mxu0
        %v591 = vpop.f32.mrb[0].mxu0
        %592 = vdwg.mxu0
        %593 = vrot.lane.b32.xlu0 %v539, 96
        %v594 = vpop.permute.xlu0 %593
        %v596 = vsel %vm546, %v539, 0
        %v599 = vsel %vm546, %v594, 0
        %601 = vmatprep.subr.bf16.mxu0 0
        %602 = vmatpush1.bf16.xpose.msra.mxu0 %v599
        %603 = vmatprep.subr.bf16.mxu0 0
        %604 = vmatpush1.bf16.xpose.msra.mxu0 0
        %605 = vmatprep.subr.bf16.mxu0 0
        %606 = vmatpush1.bf16.xpose.msra.mxu0 0
        %607 = vmatprep.subr.bf16.mxu0 0
        %608 = vmatpush1.bf16.xpose.msra.mxu0 0
        %609 = vmatprep.subr.bf16.mxu0 0
        %610 = vmatpush1.bf16.xpose.msra.mxu0 0
        %611 = vmatprep.subr.bf16.mxu0 0
        %612 = vmatpush1.bf16.xpose.msra.mxu0 0
        %613 = vmatprep.subr.bf16.mxu0 0
        %614 = vmatpush1.bf16.xpose.msra.mxu0 0
        %615 = vmatprep.subr.bf16.mxu0 0
        %616 = vmatpush1.bf16.xpose.msra.mxu0 0
        %617 = vmatprep.subr.bf16.mxu0 0
        %618 = vmatpush1.bf16.xpose.msra.mxu0 0
        %619 = vmatprep.subr.bf16.mxu0 0
        %620 = vmatpush1.bf16.xpose.msra.mxu0 0
        %621 = vmatprep.subr.bf16.mxu0 0
        %622 = vmatpush1.bf16.xpose.msra.mxu0 0
        %623 = vmatprep.subr.bf16.mxu0 0
        %624 = vmatpush1.bf16.xpose.msra.mxu0 0
        %625 = vmatprep.subr.bf16.mxu0 0
        %626 = vmatpush1.bf16.xpose.msra.mxu0 0
        %627 = vmatprep.subr.bf16.mxu0 0
        %628 = vmatpush1.bf16.xpose.msra.mxu0 0
        %629 = vmatprep.subr.bf16.mxu0 0
        %630 = vmatpush1.bf16.xpose.msra.mxu0 0
        %631 = vmatprep.subr.bf16.mxu0 0
        %632 = vmatpush1.bf16.xpose.msra.mxu0 0
        %633 = vmatprep.mubr.bf16.mxu0 0
        %634 = vmatmul.mubr.bf16.gmra.mrb[0].mxu0 %v596
        %v635 = vpop.f32.mrb[0].mxu0
        %v636 = vadd.f32 0.0, %v635
        %v637 = vpop.f32.mrb[0].mxu0
        %v638 = vpop.f32.mrb[0].mxu0
        %v639 = vpop.f32.mrb[0].mxu0
        %640 = vdwg.mxu0
        %641 = vrot.lane.b32.xlu0 %v541, 96
        %v642 = vpop.permute.xlu0 %641
        %v644 = vsel %vm546, %v541, 0
        %v647 = vsel %vm546, %v642, 0
        %649 = vmatprep.subr.bf16.mxu0 0
        %650 = vmatpush1.bf16.xpose.msra.mxu0 %v647
        %651 = vmatprep.subr.bf16.mxu0 0
        %652 = vmatpush1.bf16.xpose.msra.mxu0 0
        %653 = vmatprep.subr.bf16.mxu0 0
        %654 = vmatpush1.bf16.xpose.msra.mxu0 0
        %655 = vmatprep.subr.bf16.mxu0 0
        %656 = vmatpush1.bf16.xpose.msra.mxu0 0
        %657 = vmatprep.subr.bf16.mxu0 0
        %658 = vmatpush1.bf16.xpose.msra.mxu0 0
        %659 = vmatprep.subr.bf16.mxu0 0
        %660 = vmatpush1.bf16.xpose.msra.mxu0 0
        %661 = vmatprep.subr.bf16.mxu0 0
        %662 = vmatpush1.bf16.xpose.msra.mxu0 0
        %663 = vmatprep.subr.bf16.mxu0 0
        %664 = vmatpush1.bf16.xpose.msra.mxu0 0
        %665 = vmatprep.subr.bf16.mxu0 0
        %666 = vmatpush1.bf16.xpose.msra.mxu0 0
        %667 = vmatprep.subr.bf16.mxu0 0
        %668 = vmatpush1.bf16.xpose.msra.mxu0 0
        %669 = vmatprep.subr.bf16.mxu0 0
        %670 = vmatpush1.bf16.xpose.msra.mxu0 0
        %671 = vmatprep.subr.bf16.mxu0 0
        %672 = vmatpush1.bf16.xpose.msra.mxu0 0
        %673 = vmatprep.subr.bf16.mxu0 0
        %674 = vmatpush1.bf16.xpose.msra.mxu0 0
        %675 = vmatprep.subr.bf16.mxu0 0
        %676 = vmatpush1.bf16.xpose.msra.mxu0 0
        %677 = vmatprep.subr.bf16.mxu0 0
        %678 = vmatpush1.bf16.xpose.msra.mxu0 0
        %679 = vmatprep.subr.bf16.mxu0 0
        %680 = vmatpush1.bf16.xpose.msra.mxu0 0
        %681 = vmatprep.mubr.bf16.mxu0 0
        %682 = vmatmul.mubr.bf16.gmra.mrb[0].mxu0 %v644
        %v683 = vpop.f32.mrb[0].mxu0
        %v684 = vadd.f32 0.0, %v683
        %v685 = vpop.f32.mrb[0].mxu0
        %v686 = vpop.f32.mrb[0].mxu0
        %v687 = vpop.f32.mrb[0].mxu0
        %688 = vdwg.mxu0
        %689 = vrot.lane.b32.xlu0 %v543, 96
        %v690 = vpop.permute.xlu0 %689
        %v692 = vsel %vm546, %v543, 0
        %v695 = vsel %vm546, %v690, 0
        %697 = vmatprep.subr.bf16.mxu0 0
        %698 = vmatpush1.bf16.xpose.msra.mxu0 %v695
        %699 = vmatprep.subr.bf16.mxu0 0
        %700 = vmatpush1.bf16.xpose.msra.mxu0 0
        %701 = vmatprep.subr.bf16.mxu0 0
        %702 = vmatpush1.bf16.xpose.msra.mxu0 0
        %703 = vmatprep.subr.bf16.mxu0 0
        %704 = vmatpush1.bf16.xpose.msra.mxu0 0
        %705 = vmatprep.subr.bf16.mxu0 0
        %706 = vmatpush1.bf16.xpose.msra.mxu0 0
        %707 = vmatprep.subr.bf16.mxu0 0
        %708 = vmatpush1.bf16.xpose.msra.mxu0 0
        %709 = vmatprep.subr.bf16.mxu0 0
        %710 = vmatpush1.bf16.xpose.msra.mxu0 0
        %711 = vmatprep.subr.bf16.mxu0 0
        %712 = vmatpush1.bf16.xpose.msra.mxu0 0
        %713 = vmatprep.subr.bf16.mxu0 0
        %714 = vmatpush1.bf16.xpose.msra.mxu0 0
        %715 = vmatprep.subr.bf16.mxu0 0
        %716 = vmatpush1.bf16.xpose.msra.mxu0 0
        %717 = vmatprep.subr.bf16.mxu0 0
        %718 = vmatpush1.bf16.xpose.msra.mxu0 0
        %719 = vmatprep.subr.bf16.mxu0 0
        %720 = vmatpush1.bf16.xpose.msra.mxu0 0
        %721 = vmatprep.subr.bf16.mxu0 0
        %722 = vmatpush1.bf16.xpose.msra.mxu0 0
        %723 = vmatprep.subr.bf16.mxu0 0
        %724 = vmatpush1.bf16.xpose.msra.mxu0 0
        %725 = vmatprep.subr.bf16.mxu0 0
        %726 = vmatpush1.bf16.xpose.msra.mxu0 0
        %727 = vmatprep.subr.bf16.mxu0 0
        %728 = vmatpush1.bf16.xpose.msra.mxu0 0
        %729 = vmatprep.mubr.bf16.mxu0 0
        %730 = vmatmul.mubr.bf16.gmra.mrb[0].mxu0 %v692
        %v731 = vpop.f32.mrb[0].mxu0
        %v732 = vadd.f32 0.0, %v731
        %v733 = vpop.f32.mrb[0].mxu0
        %v734 = vpop.f32.mrb[0].mxu0
        %v735 = vpop.f32.mrb[0].mxu0
        %736 = vdwg.mxu0
        %v737 = vsel %vm546, %v588, -inf
        %738 = vmax.xlane.f32.xlu0 %v737
        %v739 = vpop.xlane.xlu0 %738
        %v740 = vsel %vm546, %v636, -inf
        %741 = vmax.xlane.f32.xlu0 %v740
        %v742 = vpop.xlane.xlu0 %741
        %v743 = vsel %vm546, %v684, -inf
        %744 = vmax.xlane.f32.xlu0 %v743
        %v745 = vpop.xlane.xlu0 %744
        %v746 = vsel %vm546, %v732, -inf
        %747 = vmax.xlane.f32.xlu0 %v746
        %v748 = vpop.xlane.xlu0 %747
        %v749 = vsub.f32 %v588, %v739
        %v750 = vsub.f32 %v636, %v742
        %v751 = vsub.f32 %v684, %v745
        %v752 = vsub.f32 %v732, %v748
        %v753 = vmul.f32 %v749, 1.442695
        %v754 = vpow.pop %v753
        %v755 = vmul.f32 %v750, 1.442695
        %v756 = vpow.pop %v755
        %v757 = vmul.f32 %v751, 1.442695
        %v758 = vpow.pop %v757
        %v759 = vmul.f32 %v752, 1.442695
        %v760 = vpow.pop %v759
        %v761 = vsel %vm546, %v754, 0.0
        %762 = vadd.xlane.f32.xlu0 %v761
        %v763 = vpop.xlane.xlu0 %762
        %v764 = vsel %vm546, %v756, 0.0
        %765 = vadd.xlane.f32.xlu0 %v764
        %v766 = vpop.xlane.xlu0 %765
        %v767 = vsel %vm546, %v758, 0.0
        %768 = vadd.xlane.f32.xlu0 %v767
        %v769 = vpop.xlane.xlu0 %768
        %v770 = vsel %vm546, %v760, 0.0
        %771 = vadd.xlane.f32.xlu0 %v770
        %v772 = vpop.xlane.xlu0 %771
        %v773 = vrcp.pop %v763
        %v774 = vrcp.pop %v766
        %v775 = vrcp.pop %v769
        %v776 = vrcp.pop %v772
        %v777 = vmul.f32 %v754, %v773
        %v778 = vmul.f32 %v756, %v774
        %v779 = vmul.f32 %v758, %v775
        %v780 = vmul.f32 %v760, %v776
        %v781 = vpack.c.bf16 %v777, %v777
        %v782 = vpack.c.bf16 %v778, %v778
        %v783 = vpack.c.bf16 %v779, %v779
        %v784 = vpack.c.bf16 %v780, %v780
        %785 = vrot.lane.b32.xlu0 %v536, 64
        %v786 = vpop.permute.xlu0 %785
        %v788 = vsel %vm546, %v781, 0
        %vm790 = vcmask 1043456
        %v792 = vsel %vm790, %v786, 0
        %794 = vmatprep.subr.bf16.mxu0 0
        %795 = vmatpush1.bf16.msra.mxu0 %v792
        %796 = vmatprep.subr.bf16.mxu0 0
        %797 = vmatpush1.bf16.msra.mxu0 0
        %798 = vmatprep.subr.bf16.mxu0 0
        %799 = vmatpush1.bf16.msra.mxu0 0
        %800 = vmatprep.subr.bf16.mxu0 0
        %801 = vmatpush1.bf16.msra.mxu0 0
        %802 = vmatprep.subr.bf16.mxu0 0
        %803 = vmatpush1.bf16.msra.mxu0 0
        %804 = vmatprep.subr.bf16.mxu0 0
        %805 = vmatpush1.bf16.msra.mxu0 0
        %806 = vmatprep.subr.bf16.mxu0 0
        %807 = vmatpush1.bf16.msra.mxu0 0
        %808 = vmatprep.subr.bf16.mxu0 0
        %809 = vmatpush1.bf16.msra.mxu0 0
        %810 = vmatprep.subr.bf16.mxu0 0
        %811 = vmatpush1.bf16.msra.mxu0 0
        %812 = vmatprep.subr.bf16.mxu0 0
        %813 = vmatpush1.bf16.msra.mxu0 0
        %814 = vmatprep.subr.bf16.mxu0 0
        %815 = vmatpush1.bf16.msra.mxu0 0
        %816 = vmatprep.subr.bf16.mxu0 0
        %817 = vmatpush1.bf16.msra.mxu0 0
        %818 = vmatprep.subr.bf16.mxu0 0
        %819 = vmatpush1.bf16.msra.mxu0 0
        %820 = vmatprep.subr.bf16.mxu0 0
        %821 = vmatpush1.bf16.msra.mxu0 0
        %822 = vmatprep.subr.bf16.mxu0 0
        %823 = vmatpush1.bf16.msra.mxu0 0
        %824 = vmatprep.subr.bf16.mxu0 0
        %825 = vmatpush1.bf16.msra.mxu0 0
        %826 = vmatprep.mubr.bf16.mxu0 0
        %827 = vmatmul.mubr.bf16.gmra.mrb[0].mxu0 %v788
        %v828 = vpop.f32.mrb[0].mxu0
        %v829 = vadd.f32 0.0, %v828
        %v830 = vpop.f32.mrb[0].mxu0
        %v831 = vpop.f32.mrb[0].mxu0
        %v832 = vpop.f32.mrb[0].mxu0
        %833 = vdwg.mxu0
        %834 = vrot.lane.b32.xlu0 %v539, 64
        %v835 = vpop.permute.xlu0 %834
        %v837 = vsel %vm546, %v782, 0
        %v840 = vsel %vm790, %v835, 0
        %842 = vmatprep.subr.bf16.mxu0 0
        %843 = vmatpush1.bf16.msra.mxu0 %v840
        %844 = vmatprep.subr.bf16.mxu0 0
        %845 = vmatpush1.bf16.msra.mxu0 0
        %846 = vmatprep.subr.bf16.mxu0 0
        %847 = vmatpush1.bf16.msra.mxu0 0
        %848 = vmatprep.subr.bf16.mxu0 0
        %849 = vmatpush1.bf16.msra.mxu0 0
        %850 = vmatprep.subr.bf16.mxu0 0
        %851 = vmatpush1.bf16.msra.mxu0 0
        %852 = vmatprep.subr.bf16.mxu0 0
        %853 = vmatpush1.bf16.msra.mxu0 0
        %854 = vmatprep.subr.bf16.mxu0 0
        %855 = vmatpush1.bf16.msra.mxu0 0
        %856 = vmatprep.subr.bf16.mxu0 0
        %857 = vmatpush1.bf16.msra.mxu0 0
        %858 = vmatprep.subr.bf16.mxu0 0
        %859 = vmatpush1.bf16.msra.mxu0 0
        %860 = vmatprep.subr.bf16.mxu0 0
        %861 = vmatpush1.bf16.msra.mxu0 0
        %862 = vmatprep.subr.bf16.mxu0 0
        %863 = vmatpush1.bf16.msra.mxu0 0
        %864 = vmatprep.subr.bf16.mxu0 0
        %865 = vmatpush1.bf16.msra.mxu0 0
        %866 = vmatprep.subr.bf16.mxu0 0
        %867 = vmatpush1.bf16.msra.mxu0 0
        %868 = vmatprep.subr.bf16.mxu0 0
        %869 = vmatpush1.bf16.msra.mxu0 0
        %870 = vmatprep.subr.bf16.mxu0 0
        %871 = vmatpush1.bf16.msra.mxu0 0
        %872 = vmatprep.subr.bf16.mxu0 0
        %873 = vmatpush1.bf16.msra.mxu0 0
        %874 = vmatprep.mubr.bf16.mxu0 0
        %875 = vmatmul.mubr.bf16.gmra.mrb[0].mxu0 %v837
        %v876 = vpop.f32.mrb[0].mxu0
        %v877 = vadd.f32 0.0, %v876
        %v878 = vpop.f32.mrb[0].mxu0
        %v879 = vpop.f32.mrb[0].mxu0
        %v880 = vpop.f32.mrb[0].mxu0
        %881 = vdwg.mxu0
        %882 = vrot.lane.b32.xlu0 %v541, 64
        %v883 = vpop.permute.xlu0 %882
        %v885 = vsel %vm546, %v783, 0
        %v888 = vsel %vm790, %v883, 0
        %890 = vmatprep.subr.bf16.mxu0 0
        %891 = vmatpush1.bf16.msra.mxu0 %v888
        %892 = vmatprep.subr.bf16.mxu0 0
        %893 = vmatpush1.bf16.msra.mxu0 0
        %894 = vmatprep.subr.bf16.mxu0 0
        %895 = vmatpush1.bf16.msra.mxu0 0
        %896 = vmatprep.subr.bf16.mxu0 0
        %897 = vmatpush1.bf16.msra.mxu0 0
        %898 = vmatprep.subr.bf16.mxu0 0
        %899 = vmatpush1.bf16.msra.mxu0 0
        %900 = vmatprep.subr.bf16.mxu0 0
        %901 = vmatpush1.bf16.msra.mxu0 0
        %902 = vmatprep.subr.bf16.mxu0 0
        %903 = vmatpush1.bf16.msra.mxu0 0
        %904 = vmatprep.subr.bf16.mxu0 0
        %905 = vmatpush1.bf16.msra.mxu0 0
        %906 = vmatprep.subr.bf16.mxu0 0
        %907 = vmatpush1.bf16.msra.mxu0 0
        %908 = vmatprep.subr.bf16.mxu0 0
        %909 = vmatpush1.bf16.msra.mxu0 0
        %910 = vmatprep.subr.bf16.mxu0 0
        %911 = vmatpush1.bf16.msra.mxu0 0
        %912 = vmatprep.subr.bf16.mxu0 0
        %913 = vmatpush1.bf16.msra.mxu0 0
        %914 = vmatprep.subr.bf16.mxu0 0
        %915 = vmatpush1.bf16.msra.mxu0 0
        %916 = vmatprep.subr.bf16.mxu0 0
        %917 = vmatpush1.bf16.msra.mxu0 0
        %918 = vmatprep.subr.bf16.mxu0 0
        %919 = vmatpush1.bf16.msra.mxu0 0
        %920 = vmatprep.subr.bf16.mxu0 0
        %921 = vmatpush1.bf16.msra.mxu0 0
        %922 = vmatprep.mubr.bf16.mxu0 0
        %923 = vmatmul.mubr.bf16.gmra.mrb[0].mxu0 %v885
        %v924 = vpop.f32.mrb[0].mxu0
        %v925 = vadd.f32 0.0, %v924
        %v926 = vpop.f32.mrb[0].mxu0
        %v927 = vpop.f32.mrb[0].mxu0
        %v928 = vpop.f32.mrb[0].mxu0
        %929 = vdwg.mxu0
        %930 = vrot.lane.b32.xlu0 %v543, 64
        %v931 = vpop.permute.xlu0 %930
        %v933 = vsel %vm546, %v784, 0
        %v936 = vsel %vm790, %v931, 0
        %938 = vmatprep.subr.bf16.mxu0 0
        %939 = vmatpush1.bf16.msra.mxu0 %v936
        %940 = vmatprep.subr.bf16.mxu0 0
        %941 = vmatpush1.bf16.msra.mxu0 0
        %942 = vmatprep.subr.bf16.mxu0 0
        %943 = vmatpush1.bf16.msra.mxu0 0
        %944 = vmatprep.subr.bf16.mxu0 0
        %945 = vmatpush1.bf16.msra.mxu0 0
        %946 = vmatprep.subr.bf16.mxu0 0
        %947 = vmatpush1.bf16.msra.mxu0 0
        %948 = vmatprep.subr.bf16.mxu0 0
        %949 = vmatpush1.bf16.msra.mxu0 0
        %950 = vmatprep.subr.bf16.mxu0 0
        %951 = vmatpush1.bf16.msra.mxu0 0
        %952 = vmatprep.subr.bf16.mxu0 0
        %953 = vmatpush1.bf16.msra.mxu0 0
        %954 = vmatprep.subr.bf16.mxu0 0
        %955 = vmatpush1.bf16.msra.mxu0 0
        %956 = vmatprep.subr.bf16.mxu0 0
        %957 = vmatpush1.bf16.msra.mxu0 0
        %958 = vmatprep.subr.bf16.mxu0 0
        %959 = vmatpush1.bf16.msra.mxu0 0
        %960 = vmatprep.subr.bf16.mxu0 0
        %961 = vmatpush1.bf16.msra.mxu0 0
        %962 = vmatprep.subr.bf16.mxu0 0
        %963 = vmatpush1.bf16.msra.mxu0 0
        %964 = vmatprep.subr.bf16.mxu0 0
        %965 = vmatpush1.bf16.msra.mxu0 0
        %966 = vmatprep.subr.bf16.mxu0 0
        %967 = vmatpush1.bf16.msra.mxu0 0
        %968 = vmatprep.subr.bf16.mxu0 0
        %969 = vmatpush1.bf16.msra.mxu0 0
        %970 = vmatprep.mubr.bf16.mxu0 0
        %971 = vmatmul.mubr.bf16.gmra.mrb[0].mxu0 %v933
        %v972 = vpop.f32.mrb[0].mxu0
        %v973 = vadd.f32 0.0, %v972
        %v974 = vpop.f32.mrb[0].mxu0
        %v975 = vpop.f32.mrb[0].mxu0
        %v976 = vpop.f32.mrb[0].mxu0
        %977 = vdwg.mxu0
        %979 = vrot.lane.b32.xlu0 %v877, 8
        %v980 = vpop.permute.xlu0 %979
        %983 = vrot.lane.b32.xlu0 %v925, 16
        %v984 = vpop.permute.xlu0 %983
        %987 = vrot.lane.b32.xlu0 %v973, 24
        %v988 = vpop.permute.xlu0 %987
        %v990 = vsel %vm546, %v829, %v980
        %vm991 = vcmask 130048
        %v992 = vsel %vm991, %v990, %v984
        %vm993 = vcmask 195584
        %v994 = vsel %vm993, %v992, %v988
        %v995 = vpack.c.bf16 %v994, %v994
        %v996 = vld [vmem:[%s5] sm:$0xf]
        %v997 = vld [vmem:[%s5 + $0x4] sm:$0xf]
        %v998 = vld [vmem:[%s5 + $0x8] sm:$0xf]
        %v999 = vld [vmem:[%s5 + $0xc] sm:$0xf]
        %v1000 = vld [vmem:[%s6] sm:$0x1]
        %v1002 = vlaneseq
        %v1003 = vshrl.u32 %v1002, 7
        %v1004 = vsub.s32 0, %v1003
        %v1005 = vrot.slane %v1000, %v1004
        %v1011 = vunpack.c.l.b16 %v996
        %v1012 = vunpack.c.l.b16 %v997
        %v1013 = vunpack.c.l.b16 %v998
        %v1014 = vunpack.c.l.b16 %v999
        %v1015 = vpack.c.b16 %v1012, %v1011
        %v1016 = vpack.c.b16 %v1014, %v1013
        %v1020 = vsel %vm438, %v995, 0
        %1022 = vmatprep.subr.bf16.mxu0 0
        %1023 = vmatpush1.bf16.msra.mxu0 %v1015
        %1024 = vmatprep.subr.bf16.mxu0 0
        %1025 = vmatpush1.bf16.msra.mxu0 %v1016
        %1026 = vmatprep.subr.bf16.mxu0 0
        %1027 = vmatpush1.bf16.msra.mxu0 0
        %1028 = vmatprep.subr.bf16.mxu0 0
        %1029 = vmatpush1.bf16.msra.mxu0 0
        %1030 = vmatprep.subr.bf16.mxu0 0
        %1031 = vmatpush1.bf16.msra.mxu0 0
        %1032 = vmatprep.subr.bf16.mxu0 0
        %1033 = vmatpush1.bf16.msra.mxu0 0
        %1034 = vmatprep.subr.bf16.mxu0 0
        %1035 = vmatpush1.bf16.msra.mxu0 0
        %1036 = vmatprep.subr.bf16.mxu0 0
        %1037 = vmatpush1.bf16.msra.mxu0 0
        %1038 = vmatprep.subr.bf16.mxu0 0
        %1039 = vmatpush1.bf16.msra.mxu0 0
        %1040 = vmatprep.subr.bf16.mxu0 0
        %1041 = vmatpush1.bf16.msra.mxu0 0
        %1042 = vmatprep.subr.bf16.mxu0 0
        %1043 = vmatpush1.bf16.msra.mxu0 0
        %1044 = vmatprep.subr.bf16.mxu0 0
        %1045 = vmatpush1.bf16.msra.mxu0 0
        %1046 = vmatprep.subr.bf16.mxu0 0
        %1047 = vmatpush1.bf16.msra.mxu0 0
        %1048 = vmatprep.subr.bf16.mxu0 0
        %1049 = vmatpush1.bf16.msra.mxu0 0
        %1050 = vmatprep.subr.bf16.mxu0 0
        %1051 = vmatpush1.bf16.msra.mxu0 0
        %1052 = vmatprep.subr.bf16.mxu0 0
        %1053 = vmatpush1.bf16.msra.mxu0 0
        %1054 = vmatprep.mubr.bf16.mxu0 0
        %1055 = vmatmul.mubr.bf16.gmra.mrb[0].mxu0 %v1020
        %v1056 = vpop.f32.mrb[0].mxu0
        %v1057 = vadd.f32 %v1005, %v1056
        %v1058 = vpop.f32.mrb[0].mxu0
        %v1059 = vpop.f32.mrb[0].mxu0
        %v1060 = vpop.f32.mrb[0].mxu0
        %1061 = vdwg.mxu0
        %v1062 = vadd.f32 %v437, %v1057
        %v1063 = vsel %vm438, %v1062, 0.0
        %1064 = vadd.xlane.f32.xlu0 %v1063
        %v1065 = vpop.xlane.xlu0 %1064
        %v1066 = vmul.f32 %v1065, %v442
        %v1067 = vsub.f32 %v1062, %v1066
        %v1068 = vmul.f32 %v1067, %v1067
        %v1069 = vsel %vm438, %v1068, 0.0
        %1070 = vadd.xlane.f32.xlu0 %v1069
        %v1071 = vpop.xlane.xlu0 %1070
        %v1072 = vmul.f32 %v1071, %v442
        %v1073 = vadd.f32 %v1072, 1e-05
        %v1074 = vrsqrt.pop %v1073
        %v1075 = vmul.f32 %v1067, %v1074
        %v1076 = vld [vmem:[%s7] sm:$0x1]
        %v1078 = vlaneseq
        %v1079 = vshrl.u32 %v1078, 7
        %v1080 = vsub.s32 0, %v1079
        %v1081 = vrot.slane %v1076, %v1080
        %v1083 = vmul.f32 %v1075, %v1081
        %v1084 = vld [vmem:[%s8] sm:$0x1]
        %v1086 = vlaneseq
        %v1087 = vshrl.u32 %v1086, 7
        %v1088 = vsub.s32 0, %v1087
        %v1089 = vrot.slane %v1084, %v1088
        %v1091 = vadd.f32 %v1083, %v1089
        %v1092 = vpack.c.bf16 %v1091, %v1091
        %v1093 = vld [vmem:[%s9] sm:$0xf]
        %v1094 = vld [vmem:[%s9 + $0x4] sm:$0xf]
        %v1095 = vld [vmem:[%s9 + $0x8] sm:$0xf]
        %v1096 = vld [vmem:[%s9 + $0xc] sm:$0xf]
        %v1097 = vld [vmem:[%s10] sm:$0x1]
        %v1099 = vlaneseq
        %v1100 = vshrl.u32 %v1099, 7
        %v1101 = vsub.s32 0, %v1100
        %v1102 = vrot.slane %v1097, %v1101
        %v1108 = vunpack.c.l.b16 %v1093
        %v1109 = vunpack.c.l.b16 %v1094
        %v1110 = vunpack.c.l.b16 %v1095
        %v1111 = vunpack.c.l.b16 %v1096
        %v1112 = vpack.c.b16 %v1109, %v1108
        %v1113 = vpack.c.b16 %v1111, %v1110
        %v1117 = vsel %vm438, %v1092, 0
        %1119 = vmatprep.subr.bf16.mxu0 0
        %1120 = vmatpush1.bf16.msra.mxu0 %v1112
        %1121 = vmatprep.subr.bf16.mxu0 0
        %1122 = vmatpush1.bf16.msra.mxu0 %v1113
        %1123 = vmatprep.subr.bf16.mxu0 0
        %1124 = vmatpush1.bf16.msra.mxu0 0
        %1125 = vmatprep.subr.bf16.mxu0 0
        %1126 = vmatpush1.bf16.msra.mxu0 0
        %1127 = vmatprep.subr.bf16.mxu0 0
        %1128 = vmatpush1.bf16.msra.mxu0 0
        %1129 = vmatprep.subr.bf16.mxu0 0
        %1130 = vmatpush1.bf16.msra.mxu0 0
        %1131 = vmatprep.subr.bf16.mxu0 0
        %1132 = vmatpush1.bf16.msra.mxu0 0
        %1133 = vmatprep.subr.bf16.mxu0 0
        %1134 = vmatpush1.bf16.msra.mxu0 0
        %1135 = vmatprep.subr.bf16.mxu0 0
        %1136 = vmatpush1.bf16.msra.mxu0 0
        %1137 = vmatprep.subr.bf16.mxu0 0
        %1138 = vmatpush1.bf16.msra.mxu0 0
        %1139 = vmatprep.subr.bf16.mxu0 0
        %1140 = vmatpush1.bf16.msra.mxu0 0
        %1141 = vmatprep.subr.bf16.mxu0 0
        %1142 = vmatpush1.bf16.msra.mxu0 0
        %1143 = vmatprep.subr.bf16.mxu0 0
        %1144 = vmatpush1.bf16.msra.mxu0 0
        %1145 = vmatprep.subr.bf16.mxu0 0
        %1146 = vmatpush1.bf16.msra.mxu0 0
        %1147 = vmatprep.subr.bf16.mxu0 0
        %1148 = vmatpush1.bf16.msra.mxu0 0
        %1149 = vmatprep.subr.bf16.mxu0 0
        %1150 = vmatpush1.bf16.msra.mxu0 0
        %1151 = vmatprep.mubr.bf16.mxu0 0
        %1152 = vmatmul.mubr.bf16.gmra.mrb[0].mxu0 %v1117
        %v1153 = vpop.f32.mrb[0].mxu0
        %v1154 = vadd.f32 %v1102, %v1153
        %v1155 = vpop.f32.mrb[0].mxu0
        %v1156 = vpop.f32.mrb[0].mxu0
        %v1157 = vpop.f32.mrb[0].mxu0
        %1158 = vdwg.mxu0
        %v1159 = vmul.f32 %v1154, -1.702
        %v1160 = vmul.f32 %v1159, 1.442695
        %v1161 = vpow.pop %v1160
        %v1162 = vadd.f32 %v1161, 1.0
        %v1163 = vrcp.pop %v1162
        %v1164 = vmul.f32 1.0, %v1163
        %v1165 = vmul.f32 %v1154, %v1164
        %v1166 = vpack.c.bf16 %v1165, %v1165
        %v1167 = vld [vmem:[%s11] sm:$0xf]
        %v1168 = vld [vmem:[%s11 + $0x4] sm:$0xf]
        %v1169 = vld [vmem:[%s11 + $0x8] sm:$0xf]
        %v1170 = vld [vmem:[%s11 + $0xc] sm:$0xf]
        %v1171 = vld [vmem:[%s11 + $0x10] sm:$0xf]
        %v1172 = vld [vmem:[%s11 + $0x14] sm:$0xf]
        %v1173 = vld [vmem:[%s11 + $0x18] sm:$0xf]
        %v1174 = vld [vmem:[%s11 + $0x1c] sm:$0xf]
        %v1175 = vld [vmem:[%s11 + $0x20] sm:$0xf]
        %v1176 = vld [vmem:[%s11 + $0x24] sm:$0xf]
        %v1177 = vld [vmem:[%s11 + $0x28] sm:$0xf]
        %v1178 = vld [vmem:[%s11 + $0x2c] sm:$0xf]
        %v1179 = vld [vmem:[%s11 + $0x30] sm:$0xf]
        %v1180 = vld [vmem:[%s11 + $0x34] sm:$0xf]
        %v1181 = vld [vmem:[%s11 + $0x38] sm:$0xf]
        %v1182 = vld [vmem:[%s11 + $0x3c] sm:$0xf]
        %v1199 = vunpack.c.l.b16 %v1167
        %v1200 = vunpack.c.l.b16 %v1168
        %v1201 = vunpack.c.l.b16 %v1169
        %v1202 = vunpack.c.l.b16 %v1170
        %v1203 = vunpack.c.l.b16 %v1171
        %v1204 = vunpack.c.l.b16 %v1172
        %v1205 = vunpack.c.l.b16 %v1173
        %v1206 = vunpack.c.l.b16 %v1174
        %v1207 = vunpack.c.l.b16 %v1175
        %v1208 = vunpack.c.l.b16 %v1176
        %v1209 = vunpack.c.l.b16 %v1177
        %v1210 = vunpack.c.l.b16 %v1178
        %v1211 = vunpack.c.l.b16 %v1179
        %v1212 = vunpack.c.l.b16 %v1180
        %v1213 = vunpack.c.l.b16 %v1181
        %v1214 = vunpack.c.l.b16 %v1182
        %v1215 = vpack.c.b16 %v1200, %v1199
        %v1216 = vpack.c.b16 %v1202, %v1201
        %v1217 = vpack.c.b16 %v1204, %v1203
        %v1218 = vpack.c.b16 %v1206, %v1205
        %v1219 = vpack.c.b16 %v1208, %v1207
        %v1220 = vpack.c.b16 %v1210, %v1209
        %v1221 = vpack.c.b16 %v1212, %v1211
        %v1222 = vpack.c.b16 %v1214, %v1213
        %1231 = vmatprep.subr.bf16.mxu0 0
        %1232 = vmatpush1.bf16.msra.mxu0 %v1215
        %1233 = vmatprep.subr.bf16.mxu0 0
        %1234 = vmatpush1.bf16.msra.mxu0 %v1216
        %1235 = vmatprep.subr.bf16.mxu0 0
        %1236 = vmatpush1.bf16.msra.mxu0 %v1217
        %1237 = vmatprep.subr.bf16.mxu0 0
        %1238 = vmatpush1.bf16.msra.mxu0 %v1218
        %1239 = vmatprep.subr.bf16.mxu0 0
        %1240 = vmatpush1.bf16.msra.mxu0 %v1219
        %1241 = vmatprep.subr.bf16.mxu0 0
        %1242 = vmatpush1.bf16.msra.mxu0 %v1220
        %1243 = vmatprep.subr.bf16.mxu0 0
        %1244 = vmatpush1.bf16.msra.mxu0 %v1221
        %1245 = vmatprep.subr.bf16.mxu0 0
        %1246 = vmatpush1.bf16.msra.mxu0 %v1222
        %1247 = vmatprep.subr.bf16.mxu0 0
        %1248 = vmatpush1.bf16.msra.mxu0 0
        %1249 = vmatprep.subr.bf16.mxu0 0
        %1250 = vmatpush1.bf16.msra.mxu0 0
        %1251 = vmatprep.subr.bf16.mxu0 0
        %1252 = vmatpush1.bf16.msra.mxu0 0
        %1253 = vmatprep.subr.bf16.mxu0 0
        %1254 = vmatpush1.bf16.msra.mxu0 0
        %1255 = vmatprep.subr.bf16.mxu0 0
        %1256 = vmatpush1.bf16.msra.mxu0 0
        %1257 = vmatprep.subr.bf16.mxu0 0
        %1258 = vmatpush1.bf16.msra.mxu0 0
        %1259 = vmatprep.subr.bf16.mxu0 0
        %1260 = vmatpush1.bf16.msra.mxu0 0
        %1261 = vmatprep.subr.bf16.mxu0 0
        %1262 = vmatpush1.bf16.msra.mxu0 0
        %1263 = vmatprep.mubr.bf16.mxu0 0
        %1264 = vmatmul.mubr.bf16.gmra.mrb[0].mxu0 %v1166
        %v1265 = vpop.f32.mrb[0].mxu0
        %v1266 = vadd.f32 0.0, %v1265
        %v1267 = vpop.f32.mrb[0].mxu0
        %v1268 = vpop.f32.mrb[0].mxu0
        %v1269 = vpop.f32.mrb[0].mxu0
        %1270 = vdwg.mxu0
        %v1271 = vadd.f32 %v1062, %v1266
        %v1272 = vld [vmem:[%s12] sm:$0x1]
        %v1274 = vlaneseq
        %v1275 = vshrl.u32 %v1274, 7
        %v1276 = vsub.s32 0, %v1275
        %v1277 = vrot.slane %v1272, %v1276
        %v1279 = vadd.f32 %v1271, %v1277
        %1280 = vst.msk [vmem:[%s431] sm:$0xff] %vm438, %v1279
        %s1281 = sand.u32 %s313, 1
        %s1282 = scalar_lea.sflag [#allocation3], %s1281
        %s1283 = sand.u32 %s313, 1
        %s1284 = smul.addr %s1283, 8
        %s1285 = scalar_lea.vmem [#allocation2], %s1284
        // Predicated region
        $region73: #{tpu_custom_call.1} parent=71 // pred_check
          %p1286 = pneg %p323
        $region74: #{tpu_custom_call.1} parent=71 // pred_check_branch
          %1288 = sbr.rel (%p1286) target = $region76
        $region75: #{tpu_custom_call.1} parent=71 // pred_region
          %s1290 = ssub.s32 128, 128
          %1291 = vsyncadd %s1282, %s1290
          %s1292 = smul.addr %s27, 128
          %s1293 = scalar_lea.hbm %s13, %s1292
          %s1295 = sshll.u32 %s1285, 4
          %s1296 = int_to_ptr.vmem [resolvable:$true] %s1295
          %1298 = dma.vmem_to_hbm [thread:$0]  %s1296, 128, %s1293, %s1282
        $region76: #{tpu_custom_call.1} parent=71 // pred_fallthru
          _
      $region72: #{tpu_custom_call.1} parent=5 // pred_fallthru
        _
      %p1299 = scmp.le.s32.totalorder 2, %s22
      // Predicated region
      $region77: #{tpu_custom_call.1} parent=5 // pred_check
        %p1300 = pneg %p1299
      $region78: #{tpu_custom_call.1} parent=5 // pred_check_branch
        %1302 = sbr.rel (%p1300) target = $region80
      $region79: #{tpu_custom_call.1} parent=5 // pred_region
        %s1303 = ssub.s32 %s22, 2
        // Predicated region
        $region81: #{tpu_custom_call.1} parent=79 // pred_check
          %p1304 = pneg %p329
        $region82: #{tpu_custom_call.1} parent=79 // pred_check_branch
          %1306 = sbr.rel (%p1304) target = $region84
        $region83: #{tpu_custom_call.1} parent=79 // pred_region
          %s1307 = sand.u32 %s314, 1
          %s1308 = scalar_lea.sflag [#allocation3], %s1307
          %s1309 = sand.u32 %s314, 1
          %s1310 = smul.addr %s1309, 8
          %s1311 = scalar_lea.vmem [#allocation2], %s1310
          %1312 = dma.done %s1308, 128
        $region84: #{tpu_custom_call.1} parent=79 // pred_fallthru
          _
      $region80: #{tpu_custom_call.1} parent=5 // pred_fallthru
        _
    $region6: #{tpu_custom_call.1} parent=1 // loop_footer
      %s26 = sadd.s32 1, %s22
    $region7: #{tpu_custom_call.1} parent=1 // loop_footer_branch
      %21 = sbr.rel target = $region3
    $region8: #{tpu_custom_call.1} parent=1 // loop_exit
      _
    %1313 = vsyncpa [#allocation3], 1
    %s1314 = scalar_lea.sflag [#allocation3], 1
    %1315 = vsyncpa %s1314, 1

</llo_original>
